<compile_context>
chip_gen: v6e
topology: v6e:2x2x1
jax: 0.10.0
libtpu: 0.0.40
codegen_flags: <defaults>
</compile_context>

<pallas_src>
import jax
import jax.numpy as jnp
from jax.experimental import pallas as pl
from jax.experimental.pallas import tpu as pltpu

# ---------------------------- model / problem sizes ----------------------------
IN_DIM = 8
HIDDEN = 32
OUT_DIM = 4
NUM_LAYERS = 3
N_NODES = 16
N_GRAPHS = 2
N_SNAPSHOTS = 3
BATCH = 4                              # independent forward passes -> grid axis

SN = N_SNAPSHOTS * N_NODES             # 48  snapshot-stacked nodes
SN2 = 2 * SN                           # 96  TD+BU merged rows
IN2 = 2 * IN_DIM                       # 16
H = HIDDEN
H2 = 2 * HIDDEN                        # 64
LANES = 128

# ---------------------------- weight-slab layout (single operand) ----------------------------
def _align16(r):
    return ((r + 15) // 16) * 16       # bf16 native (16,128) sublane tile alignment

R_LIN1 = 0                                          # [IN2, :H2]  blockdiag(lin1_td, lin1_bu)
R_BIAS = _align16(R_LIN1 + IN2)                     # [16, :]     all biases, one row each
R_W0   = _align16(R_BIAS + 16)                      # [H2, :H2]   blockdiag(W_td_0, W_bu_0)
R_WCAT = _align16(R_W0 + H2)                        # (L-1)x[H2,:128] = [blockdiag(W_i)|blockdiag(la_{i-1})]
R_LA   = _align16(R_WCAT + (NUM_LAYERS - 1) * H2)   # [H2, :H2]   blockdiag(la_{L-1})
R_SEQ  = _align16(R_LA + H2)                        # [H2, :H ]   seq_w
R_CLS1 = _align16(R_SEQ + H2)                       # [H , :H ]   cls1_w
R_CLS2 = _align16(R_CLS1 + H)                       # [H , :OUT]  cls2_w
R_TOT  = _align16(R_CLS2 + H)

# bias rows inside the bias block
B_LIN1 = 0
B_GCN0 = 1                                          # rows 1 .. NUM_LAYERS
B_LA   = 1 + NUM_LAYERS
B_SEQ  = 2 + NUM_LAYERS
B_CLS1 = 3 + NUM_LAYERS
B_CLS2 = 4 + NUM_LAYERS
assert B_CLS2 < 16, "bias block only has 16 rows"


# ---------------------------- fused kernel ----------------------------
def fused_forward_kernel(x_ref, a_ref, r_ref, w_ref, o_ref):
    f32, bf16 = jnp.float32, jnp.bfloat16
    x = x_ref[0]                                    # [96,16] bf16  blockdiag(x, x)
    a = a_ref[0]                                    # [96,96] bf16  blockdiag(A_td, A_bu)
    r = r_ref[0]                                    # [ 4,96] bf16  blockdiag(readout, readout)
    biases = w_ref[R_BIAS:R_BIAS + 16, :].astype(f32)   # all biases, kept f32 for elementwise

    # lin1 (TD|BU merged; off-block bias contamination is never read)
    h = jnp.dot(x, w_ref[R_LIN1:R_LIN1 + IN2, 0:H2],
                preferred_element_type=f32) + biases[B_LIN1:B_LIN1 + 1, 0:H2]        # [96,64]

    # layer 0:  relu(A @ (h @ W0) + b0)        ((A@h)@W == A@(h@W))
    u = jnp.dot(h.astype(bf16), w_ref[R_W0:R_W0 + H2, 0:H2], preferred_element_type=f32)
    h = jnp.dot(a, u.astype(bf16), preferred_element_type=f32) + biases[B_GCN0:B_GCN0 + 1, 0:H2]
    h = jnp.maximum(h, 0.0)

    # layers 1..L-1 with fused [W_i | la_{i-1}] weights: 2 serial matmuls per layer
    acc = jnp.zeros((SN2, H2), f32)
    for i in range(1, NUM_LAYERS):
        wcat = w_ref[R_WCAT + (i - 1) * H2:R_WCAT + i * H2, :]                       # [64,128]
        u = jnp.dot(h.astype(bf16), wcat, preferred_element_type=f32)                # [96,128]
        acc = acc + u[:, H2:2 * H2]                                                  # += h @ la_{i-1}
        h = jnp.dot(a, u[:, 0:H2].astype(bf16), preferred_element_type=f32) \
            + biases[B_GCN0 + i:B_GCN0 + i + 1, 0:H2]
        h = jnp.maximum(h, 0.0)
    acc = acc + jnp.dot(h.astype(bf16), w_ref[R_LA:R_LA + H2, 0:H2],
                        preferred_element_type=f32)                                  # += h_L @ la_{L-1}
    acc = acc + biases[B_LA:B_LA + 1, 0:H2]

    # PoolOp (per-graph mean pool) + temporal mean over snapshots folded into one matmul
    pooled = jnp.dot(r, acc.astype(bf16), preferred_element_type=f32)                # [2G,64]
    td = pooled[0:N_GRAPHS, 0:H]
    bu = pooled[N_GRAPHS:2 * N_GRAPHS, H:H2]

    # SeqOp: concat([td,bu],1) @ seq_w  ==  td @ seq_w[:H] + bu @ seq_w[H:]
    s = (jnp.dot(td.astype(bf16), w_ref[R_SEQ:R_SEQ + H, 0:H], preferred_element_type=f32)
         + jnp.dot(bu.astype(bf16), w_ref[R_SEQ + H:R_SEQ + H2, 0:H], preferred_element_type=f32)
         + biases[B_SEQ:B_SEQ + 1, 0:H])
    s = jnp.where(s > 0.0, s, 0.01 * s)                                              # leaky_relu

    # classifier + log_softmax (f32 throughout)
    hc = jnp.maximum(jnp.dot(s.astype(bf16), w_ref[R_CLS1:R_CLS1 + H, 0:H],
                             preferred_element_type=f32) + biases[B_CLS1:B_CLS1 + 1, 0:H], 0.0)
    logits = jnp.dot(hc.astype(bf16), w_ref[R_CLS2:R_CLS2 + H, 0:OUT_DIM],
                     preferred_element_type=f32) + biases[B_CLS2:B_CLS2 + 1, 0:OUT_DIM]
    z = logits - jnp.max(logits, axis=1, keepdims=True)
    logp = z - jnp.log(jnp.sum(jnp.exp(z), axis=1, keepdims=True))                   # [G,OUT]

    # lane-dense output tile (pad to 128 lanes; wrapper slices back to OUT_DIM)
    o_ref[0] = jnp.concatenate(
        [logp, jnp.zeros((N_GRAPHS, LANES - OUT_DIM), f32)], axis=1)


# ---------------------------- wrapper ----------------------------
def network_forward(weight_slab, x_blk, a_blk, readout_blk):
    b = x_blk.shape[0]
    flops = 2 * b * (SN2 * IN2 * H2 + SN2 * H2 * H2 + NUM_LAYERS * SN2 * SN2 * H2
                     + (NUM_LAYERS - 1) * SN2 * H2 * 2 * H2 + SN2 * H2 * H2
                     + 2 * N_GRAPHS * SN2 * H2 + N_GRAPHS * H2 * H
                     + N_GRAPHS * H * H + N_GRAPHS * H * OUT_DIM)
    bytes_accessed = (weight_slab.size * 2
                      + (x_blk.size + a_blk.size + readout_blk.size) * 2
                      + b * N_GRAPHS * LANES * 4)
    out = pl.pallas_call(
        fused_forward_kernel,
        out_shape=jax.ShapeDtypeStruct((b, N_GRAPHS, LANES), jnp.float32),
        grid=(b,),
        in_specs=[
            pl.BlockSpec((1, SN2, IN2), lambda i: (i, 0, 0)),
            pl.BlockSpec((1, SN2, SN2), lambda i: (i, 0, 0)),
            pl.BlockSpec((1, 2 * N_GRAPHS, SN2), lambda i: (i, 0, 0)),
            pl.BlockSpec((R_TOT, LANES), lambda i: (0, 0)),   # weights stay VMEM-resident
        ],
        out_specs=pl.BlockSpec((1, N_GRAPHS, LANES), lambda i: (i, 0, 0)),
        compiler_params=pltpu.CompilerParams(dimension_semantics=("parallel",)),
        cost_estimate=pl.CostEstimate(flops=int(flops),
                                      transcendentals=int(2 * b * N_GRAPHS * OUT_DIM),
                                      bytes_accessed=int(bytes_accessed)),
    )(x_blk, a_blk, readout_blk, weight_slab)
    return out[:, :, :OUT_DIM]


# ---------------------------- params & packing (host side) ----------------------------
def _init_linear(key, fan_in, fan_out):
    kw, kb = jax.random.split(key)
    w = jax.random.normal(kw, (fan_in, fan_out), jnp.float32) * 0.1
    b = jax.random.normal(kb, (1, fan_out), jnp.float32) * 0.1
    return w, b


def _init_uni_block(key):
    keys = jax.random.split(key, NUM_LAYERS + 2)
    lin1_w, lin1_b = _init_linear(keys[0], IN_DIM, HIDDEN)
    gw, gb = [], []
    for i in range(NUM_LAYERS):
        w, b = _init_linear(keys[1 + i], HIDDEN, HIDDEN)
        gw.append(w)
        gb.append(b[0])
    la_w, la_b = _init_linear(keys[-1], NUM_LAYERS * HIDDEN, HIDDEN)
    return {"lin1_w": lin1_w, "lin1_b": lin1_b,
            "gnn_w": jnp.concatenate(gw, axis=0),     # [L*H, H]
            "gnn_b": jnp.stack(gb, axis=0),           # [L, H]
            "la_w": la_w, "la_b": la_b}


def init_params(key):
    k_td, k_bu, k_seq, k_c1, k_c2 = jax.random.split(key, 5)
    seq_w, seq_b = _init_linear(k_seq, 2 * HIDDEN, HIDDEN)
    c1_w, c1_b = _init_linear(k_c1, HIDDEN, HIDDEN)
    c2_w, c2_b = _init_linear(k_c2, HIDDEN, OUT_DIM)
    return {"TD": _init_uni_block(k_td), "BU": _init_uni_block(k_bu),
            "seq_w": seq_w, "seq_b": seq_b,
            "cls1_w": c1_w, "cls1_b": c1_b,
            "cls2_w": c2_w, "cls2_b": c2_b}


def _blockdiag2(a, b):
    out = jnp.zeros((a.shape[0] + b.shape[0], a.shape[1] + b.shape[1]), jnp.float32)
    out = out.at[:a.shape[0], :a.shape[1]].set(a)
    return out.at[a.shape[0]:, a.shape[1]:].set(b)


def pack_weights(params):
    """Pack every weight & bias into one [R_TOT, 128] bf16 slab (one DMA, VMEM-resident)."""
    td, bu = params["TD"], params["BU"]
    W = lambda d, i: d["gnn_w"][i * H:(i + 1) * H, :]
    LA = lambda d, i: d["la_w"][i * H:(i + 1) * H, :]

    slab = jnp.zeros((R_TOT, LANES), jnp.float32)
    slab = slab.at[R_LIN1:R_LIN1 + IN2, 0:H2].set(_blockdiag2(td["lin1_w"], bu["lin1_w"]))
    slab = slab.at[R_W0:R_W0 + H2, 0:H2].set(_blockdiag2(W(td, 0), W(bu, 0)))
    for i in range(1, NUM_LAYERS):
        wcat = jnp.concatenate([_blockdiag2(W(td, i), W(bu, i)),
                                _blockdiag2(LA(td, i - 1), LA(bu, i - 1))], axis=1)
        slab = slab.at[R_WCAT + (i - 1) * H2:R_WCAT + i * H2, 0:2 * H2].set(wcat)
    slab = slab.at[R_LA:R_LA + H2, 0:H2].set(
        _blockdiag2(LA(td, NUM_LAYERS - 1), LA(bu, NUM_LAYERS - 1)))
    slab = slab.at[R_SEQ:R_SEQ + H2, 0:H].set(params["seq_w"])
    slab = slab.at[R_CLS1:R_CLS1 + H, 0:H].set(params["cls1_w"])
    slab = slab.at[R_CLS2:R_CLS2 + H, 0:OUT_DIM].set(params["cls2_w"])
    # biases, one row each
    slab = slab.at[R_BIAS + B_LIN1, 0:H2].set(
        jnp.concatenate([td["lin1_b"][0], bu["lin1_b"][0]]))
    for i in range(NUM_LAYERS):
        slab = slab.at[R_BIAS + B_GCN0 + i, 0:H2].set(
            jnp.concatenate([td["gnn_b"][i], bu["gnn_b"][i]]))
    slab = slab.at[R_BIAS + B_LA, 0:H2].set(
        jnp.concatenate([td["la_b"][0], bu["la_b"][0]]))
    slab = slab.at[R_BIAS + B_SEQ, 0:H].set(params["seq_b"][0])
    slab = slab.at[R_BIAS + B_CLS1, 0:H].set(params["cls1_b"][0])
    slab = slab.at[R_BIAS + B_CLS2, 0:OUT_DIM].set(params["cls2_b"][0])
    return slab.astype(jnp.bfloat16)


# ---------------------------- data (host side) ----------------------------
def gcn_norm_adj(src, dst, n):
    # multi-edges counted in both aggregation and degree (PyG gcn_norm behaviour), + self loops
    a = jnp.zeros((n, n), jnp.float32).at[dst, src].add(1.0)
    a = a + jnp.eye(n, dtype=jnp.float32)
    deg = jnp.sum(a, axis=1)
    dinv = jax.lax.rsqrt(jnp.maximum(deg, 1e-12))
    return a * dinv[:, None] * dinv[None, :]


def mean_pool_matrix(batch, g):
    onehot = (batch[None, :] == jnp.arange(g)[:, None]).astype(jnp.float32)
    counts = jnp.maximum(onehot.sum(axis=1, keepdims=True), 1.0)
    return onehot / counts


def block_diag(mats):
    rows = sum(m.shape[0] for m in mats)
    cols = sum(m.shape[1] for m in mats)
    out = jnp.zeros((rows, cols), jnp.float32)
    r = c = 0
    for m in mats:
        out = out.at[r:r + m.shape[0], c:c + m.shape[1]].set(m)
        r += m.shape[0]
        c += m.shape[1]
    return out


def make_instance(key):
    batch_vec = jnp.concatenate([jnp.zeros(N_NODES // 2, jnp.int32),
                                 jnp.ones(N_NODES - N_NODES // 2, jnp.int32)])
    pool = mean_pool_matrix(batch_vec, N_GRAPHS)               # [G, N]
    xs, a_tds, a_bus = [], [], []
    for _ in range(N_SNAPSHOTS):
        key, kx, ks, kd = jax.random.split(key, 4)
        xs.append(jax.random.normal(kx, (N_NODES, IN_DIM), jnp.float32))
        src = jax.random.randint(ks, (3 * N_NODES,), 0, N_NODES)
        dst = jax.random.randint(kd, (3 * N_NODES,), 0, N_NODES)
        a_tds.append(gcn_norm_adj(src, dst, N_NODES))          # TD: edge_index
        a_bus.append(gcn_norm_adj(dst, src, N_NODES))          # BU: reversed edges
    x_stacked = jnp.concatenate(xs, axis=0)                    # [S*N, F]
    a_td = block_diag(a_tds)                                   # [S*N, S*N]
    a_bu = block_diag(a_bus)
    # graph mean pool per snapshot composed with the temporal mean over snapshots
    readout = jnp.concatenate([pool] * N_SNAPSHOTS, axis=1) / float(N_SNAPSHOTS)
    return x_stacked, a_td, a_bu, readout, xs, a_tds, a_bus, pool


def pack_instance(x_stacked, a_td, a_bu, readout):
    """Merge TD/BU into one block-diagonal system; cast matmul operands to bf16."""
    x = jnp.zeros((SN2, IN2), jnp.float32)
    x = x.at[:SN, :IN_DIM].set(x_stacked).at[SN:, IN_DIM:].set(x_stacked)
    a = jnp.zeros((SN2, SN2), jnp.float32)
    a = a.at[:SN, :SN].set(a_td).at[SN:, SN:].set(a_bu)
    r = jnp.zeros((2 * N_GRAPHS, SN2), jnp.float32)
    r = r.at[:N_GRAPHS, :SN].set(readout).at[N_GRAPHS:, SN:].set(readout)
    return x.astype(jnp.bfloat16), a.astype(jnp.bfloat16), r.astype(jnp.bfloat16)


# ---------------------------- pure-JAX f32 reference (unbatched, unfused) ----------------------------
def reference_forward(params, xs, a_tds, a_bus, pool):
    def uni(p, x, a):
        h = x @ p["lin1_w"] + p["lin1_b"]
        acc = jnp.zeros((x.shape[0], HIDDEN), jnp.float32)
        for i in range(NUM_LAYERS):
            h = jnp.maximum(
                a @ h @ p["gnn_w"][i * HIDDEN:(i + 1) * HIDDEN] + p["gnn_b"][i:i + 1], 0.0)
            acc = acc + h @ p["la_w"][i * HIDDEN:(i + 1) * HIDDEN]
        acc = acc + p["la_b"]
        return pool @ acc

    reps = []
    for x, atd, abu in zip(xs, a_tds, a_bus):
        td = uni(params["TD"], x, atd)
        bu = uni(params["BU"], x, abu)
        reps.append(jnp.concatenate([td, bu], axis=1))
    seq = jnp.mean(jnp.stack(reps, axis=0), axis=0)
    s = seq @ params["seq_w"] + params["seq_b"]
    s = jnp.where(s > 0.0, s, 0.01 * s)
    h = jnp.maximum(s @ params["cls1_w"] + params["cls1_b"], 0.0)
    logits = h @ params["cls2_w"] + params["cls2_b"]
    return jax.nn.log_softmax(logits, axis=1)


# ---------------------------- main ----------------------------
if __name__ == "__main__":
    key = jax.random.PRNGKey(0)
    k_params, k_data = jax.random.split(key)
    params = init_params(k_params)
    weight_slab = pack_weights(params)

    instances, xb, ab, rb = [], [], [], []
    kd = k_data
    for _ in range(BATCH):
        kd, ki = jax.random.split(kd)
        x_stacked, a_td, a_bu, readout, xs, a_tds, a_bus, pool = make_instance(ki)
        xi, ai, ri = pack_instance(x_stacked, a_td, a_bu, readout)
        xb.append(xi); ab.append(ai); rb.append(ri)
        instances.append((xs, a_tds, a_bus, pool))
    x_blk = jnp.stack(xb)          # [B, 96, 16]  bf16
    a_blk = jnp.stack(ab)          # [B, 96, 96]  bf16
    r_blk = jnp.stack(rb)          # [B,  4, 96]  bf16

    fwd = jax.jit(network_forward)
    out = jax.block_until_ready(fwd(weight_slab, x_blk, a_blk, r_blk))

    assert out.shape == (BATCH, N_GRAPHS, OUT_DIM)
    # rows of log_softmax exponentiate & sum to 1
    assert jnp.allclose(jnp.sum(jnp.exp(out), axis=-1), 1.0, atol=1e-3)
    # fused / merged / bf16 kernel matches the unbatched pure-f32 reference
    # (tolerance loosened for bf16 matmul operands; accumulation & tail are f32)
    for b, (xs, a_tds, a_bus, pool) in enumerate(instances):
        ref = reference_forward(params, xs, a_tds, a_bus, pool)
        assert jnp.allclose(out[b], ref, atol=5e-2, rtol=5e-2), (b, out[b], ref)
    print("KERNEL_OK")
</pallas_src>

<mosaic_0001>
module attributes {stable_mosaic.version = 11 : i64} {
  func.func @fused_forward_kernel(%arg0: i32, %arg1: memref<1x96x16xbf16, #tpu.memory_space<vmem>>, %arg2: memref<1x96x96xbf16, #tpu.memory_space<vmem>>, %arg3: memref<1x4x96xbf16, #tpu.memory_space<vmem>>, %arg4: memref<416x128xbf16, #tpu.memory_space<vmem>>, %arg5: memref<1x2x128xf32, #tpu.memory_space<vmem>>) attributes {dimension_semantics = [#tpu.dimension_semantics<parallel>], iteration_bounds = array<i64: 4>, scalar_prefetch = 0 : i64, scratch_operands = 0 : i64, tpu.core_type = #tpu.core_type<tc>, window_params = [{transform_indices = @transform_0, window_bounds = array<i64: 1, 96, 16>}, {transform_indices = @transform_1, window_bounds = array<i64: 1, 96, 96>}, {transform_indices = @transform_2, window_bounds = array<i64: 1, 4, 96>}, {pipeline_mode = #tpu.pipeline_mode<synchronous>, transform_indices = @transform_3, window_bounds = array<i64: 416, 128>}, {transform_indices = @transform_4, window_bounds = array<i64: 1, 2, 128>}]} {
    %c0 = arith.constant 0 : index
    %c0_0 = arith.constant 0 : index
    %c0_1 = arith.constant 0 : index
    %0 = vector.load %arg1[%c0, %c0_0, %c0_1] : memref<1x96x16xbf16, #tpu.memory_space<vmem>>, vector<1x96x16xbf16>
    %1 = vector.shape_cast %0 : vector<1x96x16xbf16> to vector<96x16xbf16>
    %c0_2 = arith.constant 0 : index
    %c0_3 = arith.constant 0 : index
    %c0_4 = arith.constant 0 : index
    %2 = vector.load %arg2[%c0_2, %c0_3, %c0_4] : memref<1x96x96xbf16, #tpu.memory_space<vmem>>, vector<1x96x96xbf16>
    %3 = vector.shape_cast %2 : vector<1x96x96xbf16> to vector<96x96xbf16>
    %c0_5 = arith.constant 0 : index
    %c0_6 = arith.constant 0 : index
    %c0_7 = arith.constant 0 : index
    %4 = vector.load %arg3[%c0_5, %c0_6, %c0_7] : memref<1x4x96xbf16, #tpu.memory_space<vmem>>, vector<1x4x96xbf16>
    %5 = vector.shape_cast %4 : vector<1x4x96xbf16> to vector<4x96xbf16>
    %c16 = arith.constant 16 : index
    %c0_8 = arith.constant 0 : index
    %6 = vector.load %arg4[%c16, %c0_8] : memref<416x128xbf16, #tpu.memory_space<vmem>>, vector<16x128xbf16>
    %7 = arith.extf %6 : vector<16x128xbf16> to vector<16x128xf32>
    %c0_9 = arith.constant 0 : index
    %c0_10 = arith.constant 0 : index
    %8 = vector.load %arg4[%c0_9, %c0_10] : memref<416x128xbf16, #tpu.memory_space<vmem>>, vector<16x64xbf16>
    %cst = arith.constant dense<0.000000e+00> : vector<96x64xf32>
    %9 = tpu.matmul %1, %8, %cst {dimension_numbers = #tpu.dot_dimension_numbers<[1], [0], [0], [1], [0, 0, 1, 1], [], []>} : vector<96x16xbf16>, vector<16x64xbf16>, vector<96x64xf32> -> vector<96x64xf32>
    %10 = vector.extract_strided_slice %7 {offsets = [0, 0], sizes = [1, 64], strides = [1, 1]} : vector<16x128xf32> to vector<1x64xf32>
    %11 = vector.broadcast %10 : vector<1x64xf32> to vector<96x64xf32>
    %12 = arith.addf %9, %11 : vector<96x64xf32>
    %13 = arith.truncf %12 : vector<96x64xf32> to vector<96x64xbf16>
    %c32 = arith.constant 32 : index
    %c0_11 = arith.constant 0 : index
    %14 = vector.load %arg4[%c32, %c0_11] : memref<416x128xbf16, #tpu.memory_space<vmem>>, vector<64x64xbf16>
    %cst_12 = arith.constant dense<0.000000e+00> : vector<96x64xf32>
    %15 = tpu.matmul %13, %14, %cst_12 {dimension_numbers = #tpu.dot_dimension_numbers<[1], [0], [0], [1], [0, 0, 1, 1], [], []>} : vector<96x64xbf16>, vector<64x64xbf16>, vector<96x64xf32> -> vector<96x64xf32>
    %16 = arith.truncf %15 : vector<96x64xf32> to vector<96x64xbf16>
    %cst_13 = arith.constant dense<0.000000e+00> : vector<96x64xf32>
    %17 = tpu.matmul %3, %16, %cst_13 {dimension_numbers = #tpu.dot_dimension_numbers<[1], [0], [0], [1], [0, 0, 1, 1], [], []>} : vector<96x96xbf16>, vector<96x64xbf16>, vector<96x64xf32> -> vector<96x64xf32>
    %18 = vector.extract_strided_slice %7 {offsets = [1, 0], sizes = [1, 64], strides = [1, 1]} : vector<16x128xf32> to vector<1x64xf32>
    %19 = vector.broadcast %18 : vector<1x64xf32> to vector<96x64xf32>
    %20 = arith.addf %17, %19 : vector<96x64xf32>
    %cst_14 = arith.constant 0.000000e+00 : f32
    %21 = vector.broadcast %cst_14 : f32 to vector<96x64xf32>
    %22 = arith.maximumf %20, %21 : vector<96x64xf32>
    %cst_15 = arith.constant 0.000000e+00 : f32
    %23 = vector.broadcast %cst_15 : f32 to vector<96x64xf32>
    %c96 = arith.constant 96 : index
    %c0_16 = arith.constant 0 : index
    %24 = vector.load %arg4[%c96, %c0_16] : memref<416x128xbf16, #tpu.memory_space<vmem>>, vector<64x128xbf16>
    %25 = arith.truncf %22 : vector<96x64xf32> to vector<96x64xbf16>
    %cst_17 = arith.constant dense<0.000000e+00> : vector<96x128xf32>
    %26 = tpu.matmul %25, %24, %cst_17 {dimension_numbers = #tpu.dot_dimension_numbers<[1], [0], [0], [1], [0, 0, 1, 1], [], []>} : vector<96x64xbf16>, vector<64x128xbf16>, vector<96x128xf32> -> vector<96x128xf32>
    %27 = vector.extract_strided_slice %26 {offsets = [0, 64], sizes = [96, 64], strides = [1, 1]} : vector<96x128xf32> to vector<96x64xf32>
    %28 = arith.addf %23, %27 : vector<96x64xf32>
    %29 = vector.extract_strided_slice %26 {offsets = [0, 0], sizes = [96, 64], strides = [1, 1]} : vector<96x128xf32> to vector<96x64xf32>
    %30 = arith.truncf %29 : vector<96x64xf32> to vector<96x64xbf16>
    %cst_18 = arith.constant dense<0.000000e+00> : vector<96x64xf32>
    %31 = tpu.matmul %3, %30, %cst_18 {dimension_numbers = #tpu.dot_dimension_numbers<[1], [0], [0], [1], [0, 0, 1, 1], [], []>} : vector<96x96xbf16>, vector<96x64xbf16>, vector<96x64xf32> -> vector<96x64xf32>
    %32 = vector.extract_strided_slice %7 {offsets = [2, 0], sizes = [1, 64], strides = [1, 1]} : vector<16x128xf32> to vector<1x64xf32>
    %33 = vector.broadcast %32 : vector<1x64xf32> to vector<96x64xf32>
    %34 = arith.addf %31, %33 : vector<96x64xf32>
    %cst_19 = arith.constant 0.000000e+00 : f32
    %35 = vector.broadcast %cst_19 : f32 to vector<96x64xf32>
    %36 = arith.maximumf %34, %35 : vector<96x64xf32>
    %c160 = arith.constant 160 : index
    %c0_20 = arith.constant 0 : index
    %37 = vector.load %arg4[%c160, %c0_20] : memref<416x128xbf16, #tpu.memory_space<vmem>>, vector<64x128xbf16>
    %38 = arith.truncf %36 : vector<96x64xf32> to vector<96x64xbf16>
    %cst_21 = arith.constant dense<0.000000e+00> : vector<96x128xf32>
    %39 = tpu.matmul %38, %37, %cst_21 {dimension_numbers = #tpu.dot_dimension_numbers<[1], [0], [0], [1], [0, 0, 1, 1], [], []>} : vector<96x64xbf16>, vector<64x128xbf16>, vector<96x128xf32> -> vector<96x128xf32>
    %40 = vector.extract_strided_slice %39 {offsets = [0, 64], sizes = [96, 64], strides = [1, 1]} : vector<96x128xf32> to vector<96x64xf32>
    %41 = arith.addf %28, %40 : vector<96x64xf32>
    %42 = vector.extract_strided_slice %39 {offsets = [0, 0], sizes = [96, 64], strides = [1, 1]} : vector<96x128xf32> to vector<96x64xf32>
    %43 = arith.truncf %42 : vector<96x64xf32> to vector<96x64xbf16>
    %cst_22 = arith.constant dense<0.000000e+00> : vector<96x64xf32>
    %44 = tpu.matmul %3, %43, %cst_22 {dimension_numbers = #tpu.dot_dimension_numbers<[1], [0], [0], [1], [0, 0, 1, 1], [], []>} : vector<96x96xbf16>, vector<96x64xbf16>, vector<96x64xf32> -> vector<96x64xf32>
    %45 = vector.extract_strided_slice %7 {offsets = [3, 0], sizes = [1, 64], strides = [1, 1]} : vector<16x128xf32> to vector<1x64xf32>
    %46 = vector.broadcast %45 : vector<1x64xf32> to vector<96x64xf32>
    %47 = arith.addf %44, %46 : vector<96x64xf32>
    %cst_23 = arith.constant 0.000000e+00 : f32
    %48 = vector.broadcast %cst_23 : f32 to vector<96x64xf32>
    %49 = arith.maximumf %47, %48 : vector<96x64xf32>
    %50 = arith.truncf %49 : vector<96x64xf32> to vector<96x64xbf16>
    %c224 = arith.constant 224 : index
    %c0_24 = arith.constant 0 : index
    %51 = vector.load %arg4[%c224, %c0_24] : memref<416x128xbf16, #tpu.memory_space<vmem>>, vector<64x64xbf16>
    %cst_25 = arith.constant dense<0.000000e+00> : vector<96x64xf32>
    %52 = tpu.matmul %50, %51, %cst_25 {dimension_numbers = #tpu.dot_dimension_numbers<[1], [0], [0], [1], [0, 0, 1, 1], [], []>} : vector<96x64xbf16>, vector<64x64xbf16>, vector<96x64xf32> -> vector<96x64xf32>
    %53 = arith.addf %41, %52 : vector<96x64xf32>
    %54 = vector.extract_strided_slice %7 {offsets = [4, 0], sizes = [1, 64], strides = [1, 1]} : vector<16x128xf32> to vector<1x64xf32>
    %55 = vector.broadcast %54 : vector<1x64xf32> to vector<96x64xf32>
    %56 = arith.addf %53, %55 : vector<96x64xf32>
    %57 = arith.truncf %56 : vector<96x64xf32> to vector<96x64xbf16>
    %cst_26 = arith.constant dense<0.000000e+00> : vector<4x64xf32>
    %58 = tpu.matmul %5, %57, %cst_26 {dimension_numbers = #tpu.dot_dimension_numbers<[1], [0], [0], [1], [0, 0, 1, 1], [], []>} : vector<4x96xbf16>, vector<96x64xbf16>, vector<4x64xf32> -> vector<4x64xf32>
    %59 = vector.extract_strided_slice %58 {offsets = [0, 0], sizes = [2, 32], strides = [1, 1]} : vector<4x64xf32> to vector<2x32xf32>
    %60 = vector.extract_strided_slice %58 {offsets = [2, 32], sizes = [2, 32], strides = [1, 1]} : vector<4x64xf32> to vector<2x32xf32>
    %61 = arith.truncf %59 : vector<2x32xf32> to vector<2x32xbf16>
    %c288 = arith.constant 288 : index
    %c0_27 = arith.constant 0 : index
    %62 = vector.load %arg4[%c288, %c0_27] : memref<416x128xbf16, #tpu.memory_space<vmem>>, vector<32x32xbf16>
    %cst_28 = arith.constant dense<0.000000e+00> : vector<2x32xf32>
    %63 = tpu.matmul %61, %62, %cst_28 {dimension_numbers = #tpu.dot_dimension_numbers<[1], [0], [0], [1], [0, 0, 1, 1], [], []>} : vector<2x32xbf16>, vector<32x32xbf16>, vector<2x32xf32> -> vector<2x32xf32>
    %64 = arith.truncf %60 : vector<2x32xf32> to vector<2x32xbf16>
    %c320 = arith.constant 320 : index
    %c0_29 = arith.constant 0 : index
    %65 = vector.load %arg4[%c320, %c0_29] : memref<416x128xbf16, #tpu.memory_space<vmem>>, vector<32x32xbf16>
    %cst_30 = arith.constant dense<0.000000e+00> : vector<2x32xf32>
    %66 = tpu.matmul %64, %65, %cst_30 {dimension_numbers = #tpu.dot_dimension_numbers<[1], [0], [0], [1], [0, 0, 1, 1], [], []>} : vector<2x32xbf16>, vector<32x32xbf16>, vector<2x32xf32> -> vector<2x32xf32>
    %67 = arith.addf %63, %66 : vector<2x32xf32>
    %68 = vector.extract_strided_slice %7 {offsets = [5, 0], sizes = [1, 32], strides = [1, 1]} : vector<16x128xf32> to vector<1x32xf32>
    %69 = vector.broadcast %68 : vector<1x32xf32> to vector<2x32xf32>
    %70 = arith.addf %67, %69 : vector<2x32xf32>
    %cst_31 = arith.constant 0.000000e+00 : f32
    %71 = vector.broadcast %cst_31 : f32 to vector<2x32xf32>
    %72 = arith.cmpf ogt, %70, %71 : vector<2x32xf32>
    %cst_32 = arith.constant 0.00999999977 : f32
    %73 = vector.broadcast %cst_32 : f32 to vector<2x32xf32>
    %74 = arith.mulf %73, %70 : vector<2x32xf32>
    %75 = arith.select %72, %70, %74 : vector<2x32xi1>, vector<2x32xf32>
    %76 = arith.truncf %75 : vector<2x32xf32> to vector<2x32xbf16>
    %c352 = arith.constant 352 : index
    %c0_33 = arith.constant 0 : index
    %77 = vector.load %arg4[%c352, %c0_33] : memref<416x128xbf16, #tpu.memory_space<vmem>>, vector<32x32xbf16>
    %cst_34 = arith.constant dense<0.000000e+00> : vector<2x32xf32>
    %78 = tpu.matmul %76, %77, %cst_34 {dimension_numbers = #tpu.dot_dimension_numbers<[1], [0], [0], [1], [0, 0, 1, 1], [], []>} : vector<2x32xbf16>, vector<32x32xbf16>, vector<2x32xf32> -> vector<2x32xf32>
    %79 = vector.extract_strided_slice %7 {offsets = [6, 0], sizes = [1, 32], strides = [1, 1]} : vector<16x128xf32> to vector<1x32xf32>
    %80 = vector.broadcast %79 : vector<1x32xf32> to vector<2x32xf32>
    %81 = arith.addf %78, %80 : vector<2x32xf32>
    %cst_35 = arith.constant 0.000000e+00 : f32
    %82 = vector.broadcast %cst_35 : f32 to vector<2x32xf32>
    %83 = arith.maximumf %81, %82 : vector<2x32xf32>
    %84 = arith.truncf %83 : vector<2x32xf32> to vector<2x32xbf16>
    %c384 = arith.constant 384 : index
    %c0_36 = arith.constant 0 : index
    %85 = vector.load %arg4[%c384, %c0_36] : memref<416x128xbf16, #tpu.memory_space<vmem>>, vector<32x4xbf16>
    %cst_37 = arith.constant dense<0.000000e+00> : vector<2x4xf32>
    %86 = tpu.matmul %84, %85, %cst_37 {dimension_numbers = #tpu.dot_dimension_numbers<[1], [0], [0], [1], [0, 0, 1, 1], [], []>} : vector<2x32xbf16>, vector<32x4xbf16>, vector<2x4xf32> -> vector<2x4xf32>
    %87 = vector.extract_strided_slice %7 {offsets = [7, 0], sizes = [1, 4], strides = [1, 1]} : vector<16x128xf32> to vector<1x4xf32>
    %88 = vector.broadcast %87 : vector<1x4xf32> to vector<2x4xf32>
    %89 = arith.addf %86, %88 : vector<2x4xf32>
    %cst_38 = arith.constant dense<0xFF800000> : vector<2xf32>
    %90 = vector.multi_reduction <maximumf>, %89, %cst_38 [1] : vector<2x4xf32> to vector<2xf32>
    %91 = vector.shape_cast %90 : vector<2xf32> to vector<2x1xf32>
    %92 = vector.broadcast %91 : vector<2x1xf32> to vector<2x4xf32>
    %93 = arith.subf %89, %92 : vector<2x4xf32>
    %94 = math.exp %93 : vector<2x4xf32>
    %cst_39 = arith.constant dense<0.000000e+00> : vector<2xf32>
    %95 = vector.multi_reduction <add>, %94, %cst_39 [1] : vector<2x4xf32> to vector<2xf32>
    %96 = vector.shape_cast %95 : vector<2xf32> to vector<2x1xf32>
    %97 = math.log %96 : vector<2x1xf32>
    %98 = vector.broadcast %97 : vector<2x1xf32> to vector<2x4xf32>
    %99 = arith.subf %93, %98 : vector<2x4xf32>
    %cst_40 = arith.constant 0.000000e+00 : f32
    %100 = vector.broadcast %cst_40 : f32 to vector<2x124xf32>
    %101 = tpu.concatenate %99, %100 in 1 : vector<2x4xf32>, vector<2x124xf32> -> vector<2x128xf32>
    %c0_41 = arith.constant 0 : index
    %c0_42 = arith.constant 0 : index
    %c0_43 = arith.constant 0 : index
    %102 = vector.load %arg5[%c0_41, %c0_42, %c0_43] : memref<1x2x128xf32, #tpu.memory_space<vmem>>, vector<1x2x128xf32>
    %103 = vector.shape_cast %102 : vector<1x2x128xf32> to vector<2x128xf32>
    %104 = vector.shape_cast %101 : vector<2x128xf32> to vector<1x2x128xf32>
    tpu.vector_store %arg5[%c0_41, %c0_42, %c0_43], %104 {strides = array<i32>} : memref<1x2x128xf32, #tpu.memory_space<vmem>>, vector<1x2x128xf32>,
    return
  }
  func.func @transform_0(%arg0: i32) -> (i32, i32, i32) {
    %c0_i32 = arith.constant 0 : i32
    %c0_i32_0 = arith.constant 0 : i32
    %c0_i32_1 = arith.constant 0 : i32
    return %arg0, %c0_i32, %c0_i32_0 : i32, i32, i32
  }
  func.func @transform_1(%arg0: i32) -> (i32, i32, i32) {
    %c0_i32 = arith.constant 0 : i32
    %c0_i32_0 = arith.constant 0 : i32
    %c0_i32_1 = arith.constant 0 : i32
    return %arg0, %c0_i32, %c0_i32_0 : i32, i32, i32
  }
  func.func @transform_2(%arg0: i32) -> (i32, i32, i32) {
    %c0_i32 = arith.constant 0 : i32
    %c0_i32_0 = arith.constant 0 : i32
    %c0_i32_1 = arith.constant 0 : i32
    return %arg0, %c0_i32, %c0_i32_0 : i32, i32, i32
  }
  func.func @transform_3(%arg0: i32) -> (i32, i32) {
    %c0_i32 = arith.constant 0 : i32
    %c0_i32_0 = arith.constant 0 : i32
    %c0_i32_1 = arith.constant 0 : i32
    return %c0_i32, %c0_i32_0 : i32, i32
  }
  func.func @transform_4(%arg0: i32) -> (i32, i32, i32) {
    %c0_i32 = arith.constant 0 : i32
    %c0_i32_0 = arith.constant 0 : i32
    %c0_i32_1 = arith.constant 0 : i32
    return %arg0, %c0_i32, %c0_i32_0 : i32, i32, i32
  }
}

</mosaic_0001>

<llo_original>
// kernel: network_forward.1
$region0: #{network_forward.1}
  #allocation0 [shape = 'u32[]', space=smem, size = 0x4, offset = 0x4, fixed_abs, tag = 'smem constant byte address 0x4 - core index']
  #allocation1 [shape = 'u32[144,128]{1,0:T(1,128)}', space=vmem, size = 0x12000, scoped, tag = 'internal scratch']
  %s0 = inlined_call_operand.vmem [shape: bf16[4,96,16], index: 0, kind: input, shape index: {}]
  %s1 = inlined_call_operand.hbm [shape: bf16[4,96,96], index: 1, kind: input, shape index: {}]
  %s2 = inlined_call_operand.vmem [shape: bf16[4,4,96], index: 2, kind: input, shape index: {}]
  %s3 = inlined_call_operand.vmem [shape: bf16[416,128], index: 3, kind: input, shape index: {}]
  %s4 = inlined_call_operand.hbm [shape: f32[4,2,128], index: 4, kind: output, shape index: {}]
  %s5 = sld [smem:[#allocation0]]
  $region53: #{network_forward.1} parent=0
    _
  %s7 = ssub.s32 1, %s5
  %s8 = scalar_select 0, %s7, %s5
  $region1: #{network_forward.1} parent=0
    #allocation2 [shape = 'u8[49152]{0}', space=vmem, size = 0xc000, scoped, tag = 'input window, operand 1']
    #allocation3 [shape = 's32[2]{0}', space=sflag, size = 0x8, scoped, tag = 'scoped memory for network_forward.1']
    #allocation4 [shape = 's32[2]{0}', space=sflag, size = 0x8, scoped, tag = 'scoped memory for network_forward.1']
    #allocation5 [shape = 'u8[2048]{0}', space=vmem, size = 0x800, scoped, tag = 'output window, operand 0']
    %9 = vsyncpa [#allocation3], 0
    %s10 = scalar_lea.sflag [#allocation3], 1
    %11 = vsyncpa %s10, 0
    %12 = vsyncpa [#allocation4], 0
    %s13 = scalar_lea.sflag [#allocation4], 1
    %14 = vsyncpa %s13, 0
    loop: start=0, step=1, limit=6
    $region2: #{network_forward.1} parent=1 // loop_pre_header
      _
    $region3: #{network_forward.1} parent=1 // loop_header
      %s16 = sphi 0, %s20
      %p17 = scmp.ge.s32.totalorder %s16, 6
      %s26 = sphi 0, %s28
      %s29 = sphi 0, %s26
      %s30 = sphi 0, %s29
      %s46 = sphi 0, %s30
      %s52 = sphi 0, %s54
      %s55 = sphi 0, %s52
      %s56 = sphi 0, %s55
      %s72 = sphi 0, %s56
      %s78 = sphi 0, %s80
      %s81 = sphi 0, %s78
      %s82 = sphi 0, %s81
      %s98 = sphi 0, %s82
      %s102 = sphi 0, %s102
      %s104 = sphi 0, %s102
      %s105 = sphi 0, %s104
      %s119 = sphi 0, %s105
      %s125 = sphi 0, %s127
      %s128 = sphi 0, %s125
      %s129 = sphi 0, %s128
      %s145 = sphi 0, %s129
    $region4: #{network_forward.1} parent=1 // loop_header_branch
      %19 = sbr.rel (%p17) target = $region8
    $region5: #{network_forward.1} parent=1 // loop_body
      %s21 = ssub.s32 %s16, 1
      %s22 = ssub.s32 %s16, 2
      %s23 = sadd.s32 %s16, 1
      %s24 = ssub.s32 %s16, %s23
      %p25 = scmp.eq.s32.totalorder %s24, 0
      %s27 = sadd.s32 %s26, 1
      %s28 = scalar_select %p25, %s26, %s27
      %p31 = pneg %p25
      %p32 = scmp.eq.s32.totalorder %s16, 3
      %p33 = por %p31, %p32
      %p34 = scmp.ne.s32.totalorder %s26, %s29
      %p35 = scmp.eq.s32.totalorder %s16, 0
      %p36 = por %p34, %p35
      %p37 = scmp.ne.s32.totalorder %s26, %s29
      %p38 = scmp.eq.s32.totalorder %s21, 3
      %p39 = por %p37, %p38
      %p40 = scmp.ne.s32.totalorder %s29, %s30
      %p41 = scmp.eq.s32.totalorder %s21, 0
      %p42 = por %p40, %p41
      %p43 = scmp.ne.s32.totalorder %s29, %s30
      %p44 = scmp.eq.s32.totalorder %s22, 3
      %p45 = por %p43, %p44
      %p47 = scmp.ne.s32.totalorder %s30, %s46
      %p48 = scmp.eq.s32.totalorder %s22, 0
      %p49 = por %p47, %p48
      %s50 = ssub.s32 %s16, %s23
      %p51 = scmp.eq.s32.totalorder %s50, 0
      %s53 = sadd.s32 %s52, 1
      %s54 = scalar_select %p51, %s52, %s53
      %p57 = pneg %p51
      %p58 = scmp.eq.s32.totalorder %s16, 3
      %p59 = por %p57, %p58
      %p60 = scmp.ne.s32.totalorder %s52, %s55
      %p61 = scmp.eq.s32.totalorder %s16, 0
      %p62 = por %p60, %p61
      %p63 = scmp.ne.s32.totalorder %s52, %s55
      %p64 = scmp.eq.s32.totalorder %s21, 3
      %p65 = por %p63, %p64
      %p66 = scmp.ne.s32.totalorder %s55, %s56
      %p67 = scmp.eq.s32.totalorder %s21, 0
      %p68 = por %p66, %p67
      %p69 = scmp.ne.s32.totalorder %s55, %s56
      %p70 = scmp.eq.s32.totalorder %s22, 3
      %p71 = por %p69, %p70
      %p73 = scmp.ne.s32.totalorder %s56, %s72
      %p74 = scmp.eq.s32.totalorder %s22, 0
      %p75 = por %p73, %p74
      %s76 = ssub.s32 %s16, %s23
      %p77 = scmp.eq.s32.totalorder %s76, 0
      %s79 = sadd.s32 %s78, 1
      %s80 = scalar_select %p77, %s78, %s79
      %p83 = pneg %p77
      %p84 = scmp.eq.s32.totalorder %s16, 3
      %p85 = por %p83, %p84
      %p86 = scmp.ne.s32.totalorder %s78, %s81
      %p87 = scmp.eq.s32.totalorder %s16, 0
      %p88 = por %p86, %p87
      %p89 = scmp.ne.s32.totalorder %s78, %s81
      %p90 = scmp.eq.s32.totalorder %s21, 3
      %p91 = por %p89, %p90
      %p92 = scmp.ne.s32.totalorder %s81, %s82
      %p93 = scmp.eq.s32.totalorder %s21, 0
      %p94 = por %p92, %p93
      %p95 = scmp.ne.s32.totalorder %s81, %s82
      %p96 = scmp.eq.s32.totalorder %s22, 3
      %p97 = por %p95, %p96
      %p99 = scmp.ne.s32.totalorder %s82, %s98
      %p100 = scmp.eq.s32.totalorder %s22, 0
      %p101 = por %p99, %p100
      %s103 = sadd.s32 %s102, 1
      %p106 = scmp.eq.s32.totalorder %s16, 3
      %p107 = scmp.ne.s32.totalorder %s102, %s104
      %p108 = scmp.eq.s32.totalorder %s16, 0
      %p109 = por %p107, %p108
      %p110 = scmp.ne.s32.totalorder %s102, %s104
      %p111 = scmp.eq.s32.totalorder %s21, 3
      %p112 = por %p110, %p111
      %p113 = scmp.ne.s32.totalorder %s104, %s105
      %p114 = scmp.eq.s32.totalorder %s21, 0
      %p115 = por %p113, %p114
      %p116 = scmp.ne.s32.totalorder %s104, %s105
      %p117 = scmp.eq.s32.totalorder %s22, 3
      %p118 = por %p116, %p117
      %p120 = scmp.ne.s32.totalorder %s105, %s119
      %p121 = scmp.eq.s32.totalorder %s22, 0
      %p122 = por %p120, %p121
      %s123 = ssub.s32 %s16, %s23
      %p124 = scmp.eq.s32.totalorder %s123, 0
      %s126 = sadd.s32 %s125, 1
      %s127 = scalar_select %p124, %s125, %s126
      %p130 = pneg %p124
      %p131 = scmp.eq.s32.totalorder %s16, 3
      %p132 = por %p130, %p131
      %p133 = scmp.ne.s32.totalorder %s125, %s128
      %p134 = scmp.eq.s32.totalorder %s16, 0
      %p135 = por %p133, %p134
      %p136 = scmp.ne.s32.totalorder %s125, %s128
      %p137 = scmp.eq.s32.totalorder %s21, 3
      %p138 = por %p136, %p137
      %p139 = scmp.ne.s32.totalorder %s128, %s129
      %p140 = scmp.eq.s32.totalorder %s21, 0
      %p141 = por %p139, %p140
      %p142 = scmp.ne.s32.totalorder %s128, %s129
      %p143 = scmp.eq.s32.totalorder %s22, 3
      %p144 = por %p142, %p143
      %p146 = scmp.ne.s32.totalorder %s129, %s145
      %p147 = scmp.eq.s32.totalorder %s22, 0
      %p148 = por %p146, %p147
      %p149 = scmp.le.s32.totalorder 1, %s16
      %p150 = scmp.lt.s32.totalorder %s16, 5
      %p151 = pnand %p149, %p150
      %p152 = pneg %p151
      // Predicated region
      $region9: #{network_forward.1} parent=5 // pred_check
        _
      $region10: #{network_forward.1} parent=5 // pred_check_branch
        %154 = sbr.rel (%p151) target = $region12
      $region11: #{network_forward.1} parent=5 // pred_region
        %s155 = ssub.s32 %s16, 1
        // Predicated region
        $region13: #{network_forward.1} parent=11 // pred_check
          %p156 = pneg %p115
        $region14: #{network_forward.1} parent=11 // pred_check_branch
          %158 = sbr.rel (%p156) target = $region16
        $region15: #{network_forward.1} parent=11 // pred_region
          _
        $region16: #{network_forward.1} parent=11 // pred_fallthru
          _
      $region12: #{network_forward.1} parent=5 // pred_fallthru
        _
      %p159 = scmp.lt.s32.totalorder %s16, 4
      // Predicated region
      $region17: #{network_forward.1} parent=5 // pred_check
        %p160 = pneg %p159
      $region18: #{network_forward.1} parent=5 // pred_check_branch
        %162 = sbr.rel (%p160) target = $region20
      $region19: #{network_forward.1} parent=5 // pred_region
        // Predicated region
        $region21: #{network_forward.1} parent=19 // pred_check
          %p163 = pneg %p36
        $region22: #{network_forward.1} parent=19 // pred_check_branch
          %165 = sbr.rel (%p163) target = $region24
        $region23: #{network_forward.1} parent=19 // pred_region
          %p166 = scmp.lt.s32.totalorder %s16, 3
          %s167 = scalar_select %p166, %s16, 3
          %s168 = smul.addr %s167, 12
          %s169 = smul.addr %s168, 4
          %s170 = scalar_lea.vmem %s0, %s169
        $region24: #{network_forward.1} parent=19 // pred_fallthru
          _
        // Predicated region
        $region25: #{network_forward.1} parent=19 // pred_check
          %p171 = pneg %p62
        $region26: #{network_forward.1} parent=19 // pred_check_branch
          %173 = sbr.rel (%p171) target = $region28
        $region27: #{network_forward.1} parent=19 // pred_region
          %s174 = sand.u32 %s52, 1
          %s175 = scalar_lea.sflag [#allocation3], %s174
          %s176 = sand.u32 %s52, 1
          %s177 = smul.addr %s176, 48
          %s178 = scalar_lea.vmem [#allocation2], %s177
          %s180 = ssub.s32 768, 768
          %181 = vsyncadd %s175, %s180
          %s182 = smul.addr %s16, 12
          %s183 = smul.addr %s182, 64
          %s184 = scalar_lea.hbm %s1, %s183
          %s185 = sshll.u32 %s178, 4
          %s186 = int_to_ptr.vmem [resolvable:$true] %s185
          %191 = dma.hbm_to_vmem [thread:$0]  %s184, 768, %s186, %s175, 64, 64, 4
        $region28: #{network_forward.1} parent=19 // pred_fallthru
          _
        // Predicated region
        $region29: #{network_forward.1} parent=19 // pred_check
          %p192 = pneg %p88
        $region30: #{network_forward.1} parent=19 // pred_check_branch
          %194 = sbr.rel (%p192) target = $region32
        $region31: #{network_forward.1} parent=19 // pred_region
          %p195 = scmp.lt.s32.totalorder %s16, 3
          %s196 = scalar_select %p195, %s16, 3
          %s197 = smul.addr %s196, 2
          %s198 = scalar_lea.vmem %s2, %s197
        $region32: #{network_forward.1} parent=19 // pred_fallthru
          _
      $region20: #{network_forward.1} parent=5 // pred_fallthru
        _
      %p199 = scmp.le.s32.totalorder 1, %s16
      %p200 = scmp.lt.s32.totalorder %s16, 5
      %p201 = pnand %p199, %p200
      %p202 = pneg %p201
      // Predicated region
      $region33: #{network_forward.1} parent=5 // pred_check
        _
      $region34: #{network_forward.1} parent=5 // pred_check_branch
        %204 = sbr.rel (%p201) target = $region36
      $region35: #{network_forward.1} parent=5 // pred_region
        %s205 = ssub.s32 %s16, 1
        %s206 = sand.u32 %s55, 1
        %s207 = scalar_lea.sflag [#allocation3], %s206
        %s208 = sand.u32 %s55, 1
        %s209 = smul.addr %s208, 48
        %s210 = scalar_lea.vmem [#allocation2], %s209
        // Predicated region
        $region37: #{network_forward.1} parent=35 // pred_check
          %p211 = pneg %p68
        $region38: #{network_forward.1} parent=35 // pred_check_branch
          %213 = sbr.rel (%p211) target = $region40
        $region39: #{network_forward.1} parent=35 // pred_region
          %214 = dma.done %s207, 768
        $region40: #{network_forward.1} parent=35 // pred_fallthru
          _
        %p215 = scmp.lt.s32.totalorder %s21, 3
        %s216 = scalar_select %p215, %s21, 3
        %s217 = smul.addr %s216, 12
        %s218 = smul.addr %s217, 4
        %s219 = scalar_lea.vmem %s0, %s218
        %p220 = pneg %p42
        %p221 = pneg %p39
        %s222 = sand.u32 %s55, 1
        %s223 = scalar_lea.sflag [#allocation3], %s222
        %s224 = sand.u32 %s55, 1
        %s225 = smul.addr %s224, 48
        %s226 = scalar_lea.vmem [#allocation2], %s225
        %p227 = pneg %p68
        %p228 = pneg %p65
        %p229 = scmp.lt.s32.totalorder %s21, 3
        %s230 = scalar_select %p229, %s21, 3
        %s231 = smul.addr %s230, 2
        %s232 = scalar_lea.vmem %s2, %s231
        %p233 = pneg %p94
        %p234 = pneg %p91
        %p235 = pneg %p115
        %p236 = pneg %p112
        %p237 = pneg %p141
        %p238 = pneg %p138
        %s239 = sand.u32 %s128, 1
        %s240 = scalar_lea.sflag [#allocation4], %s239
        %s241 = sand.u32 %s128, 1
        %s242 = smul.addr %s241, 2
        %s243 = scalar_lea.vmem [#allocation5], %s242
        %p244 = scmp.lt.s32.totalorder %s21, 3
        %s245 = scalar_select %p244, %s21, 3
        %s246 = smul.addr %s245, 12
        %s247 = smul.addr %s246, 4
        %s248 = scalar_lea.vmem %s0, %s247
        %p249 = scmp.lt.s32.totalorder %s21, 3
        %s250 = scalar_select %p249, %s21, 3
        %s251 = smul.addr %s250, 2
        %s252 = scalar_lea.vmem %s2, %s251
        %v254 = vld [vmem:[%s248] sm:$0xf]
        %v255 = vld [vmem:[%s248 + $0x4] sm:$0xf]
        %v256 = vld [vmem:[%s248 + $0x8] sm:$0xf]
        %v257 = vld [vmem:[%s248 + $0xc] sm:$0xf]
        %v258 = vld [vmem:[%s248 + $0x10] sm:$0xf]
        %v259 = vld [vmem:[%s248 + $0x14] sm:$0xf]
        %v260 = vld [vmem:[%s248 + $0x18] sm:$0xf]
        %v261 = vld [vmem:[%s248 + $0x1c] sm:$0xf]
        %v262 = vld [vmem:[%s248 + $0x20] sm:$0xf]
        %v263 = vld [vmem:[%s248 + $0x24] sm:$0xf]
        %v264 = vld [vmem:[%s248 + $0x28] sm:$0xf]
        %v265 = vld [vmem:[%s248 + $0x2c] sm:$0xf]
        %v266 = vld [vmem:[%s210] sm:$0xf]
        %v267 = vld [vmem:[%s210 + $0x4] sm:$0xf]
        %v268 = vld [vmem:[%s210 + $0x8] sm:$0xf]
        %v269 = vld [vmem:[%s210 + $0xc] sm:$0xf]
        %v270 = vld [vmem:[%s210 + $0x10] sm:$0xf]
        %v271 = vld [vmem:[%s210 + $0x14] sm:$0xf]
        %v272 = vld [vmem:[%s210 + $0x18] sm:$0xf]
        %v273 = vld [vmem:[%s210 + $0x1c] sm:$0xf]
        %v274 = vld [vmem:[%s210 + $0x20] sm:$0xf]
        %v275 = vld [vmem:[%s210 + $0x24] sm:$0xf]
        %v276 = vld [vmem:[%s210 + $0x28] sm:$0xf]
        %v277 = vld [vmem:[%s210 + $0x2c] sm:$0xf]
        %v278 = vld [vmem:[%s252] sm:$0x3]
        %v279 = vld [vmem:[%s3 + $0x8] sm:$0xf]
        %v280 = vunpack.c.l.bf16 %v279
        %v281 = vld [vmem:[%s3] sm:$0xf]
        %v282 = vld [vmem:[%s3 + $0x4] sm:$0xf]
        %v283 = vlaneseq
        %v284 = vshrl.u32 %v283, 7
        %v285 = vsub.s32 0, %v284
        %v286 = vrot.slane %v280, %v285
        %v299 = vunpack.c.l.b16 %v254
        %v300 = vunpack.c.l.b16 %v255
        %v301 = vunpack.c.l.b16 %v256
        %v302 = vunpack.c.l.b16 %v257
        %v303 = vunpack.c.l.b16 %v258
        %v304 = vunpack.c.l.b16 %v259
        %v305 = vunpack.c.l.b16 %v260
        %v306 = vunpack.c.l.b16 %v261
        %v307 = vunpack.c.l.b16 %v262
        %v308 = vunpack.c.l.b16 %v263
        %v309 = vunpack.c.l.b16 %v264
        %v310 = vunpack.c.l.b16 %v265
        %v311 = vpack.c.b16 %v300, %v299
        %v312 = vpack.c.b16 %v302, %v301
        %v313 = vpack.c.b16 %v304, %v303
        %v314 = vpack.c.b16 %v306, %v305
        %v315 = vpack.c.b16 %v308, %v307
        %v316 = vpack.c.b16 %v310, %v309
        %v319 = vunpack.c.l.b16 %v281
        %v320 = vunpack.c.l.b16 %v282
        %v321 = vpack.c.b16 %v320, %v319
        %vm323 = vcmask 130048
        %v325 = vsel %vm323, %v311, 0
        %v328 = vsel %vm323, %v312, 0
        %v331 = vsel %vm323, %v313, 0
        %v334 = vsel %vm323, %v314, 0
        %v337 = vsel %vm323, %v315, 0
        %v340 = vsel %vm323, %v316, 0
        %342 = vmatprep.subr.bf16.mxu0 0
        %343 = vmatpush1.bf16.msra.mxu0 0
        %344 = vmatprep.subr.bf16.mxu0 0
        %345 = vmatpush1.bf16.msra.mxu0 0
        %346 = vmatprep.subr.bf16.mxu0 0
        %347 = vmatpush1.bf16.msra.mxu0 0
        %348 = vmatprep.subr.bf16.mxu0 0
        %349 = vmatpush1.bf16.msra.mxu0 0
        %350 = vmatprep.subr.bf16.mxu0 0
        %351 = vmatpush1.bf16.msra.mxu0 0
        %352 = vmatprep.subr.bf16.mxu0 0
        %353 = vmatpush1.bf16.msra.mxu0 0
        %354 = vmatprep.subr.bf16.mxu0 0
        %355 = vmatpush1.bf16.msra.mxu0 0
        %356 = vmatprep.subr.bf16.mxu0 0
        %357 = vmatpush1.bf16.msra.mxu0 %v321
        %358 = vmatprep.subr.bf16.mxu0 0
        %359 = vmatpush2.bf16.msra.mxu0 0
        %360 = vmatprep.subr.bf16.mxu0 0
        %361 = vmatpush2.bf16.msra.mxu0 0
        %362 = vmatprep.subr.bf16.mxu0 0
        %363 = vmatpush2.bf16.msra.mxu0 0
        %364 = vmatprep.subr.bf16.mxu0 0
        %365 = vmatpush2.bf16.msra.mxu0 0
        %366 = vmatprep.subr.bf16.mxu0 0
        %367 = vmatpush2.bf16.msra.mxu0 0
        %368 = vmatprep.subr.bf16.mxu0 0
        %369 = vmatpush2.bf16.msra.mxu0 0
        %370 = vmatprep.subr.bf16.mxu0 0
        %371 = vmatpush2.bf16.msra.mxu0 0
        %372 = vmatprep.subr.bf16.mxu0 0
        %373 = vmatpush2.bf16.msra.mxu0 0
        %374 = vmatprep.mubr.bf16.mxu0 0
        %375 = vmatmul.mubr.bf16.gmra.mxu0 %v325
        %v376 = vpop.f32.mrf.mxu0
        %v377 = vadd.f32 %v286, %v376
        %v378 = vpop.f32.mrf.mxu0
        %v379 = vpop.f32.mrf.mxu0
        %v380 = vadd.f32 %v286, %v379
        %v381 = vpop.f32.mrf.mxu0
        %382 = vmatprep.mubr.bf16.mxu0 0
        %383 = vmatmul.mubr.bf16.gmra.mxu0 %v328
        %v384 = vpop.f32.mrf.mxu0
        %v385 = vadd.f32 %v286, %v384
        %v386 = vpop.f32.mrf.mxu0
        %v387 = vpop.f32.mrf.mxu0
        %v388 = vadd.f32 %v286, %v387
        %v389 = vpop.f32.mrf.mxu0
        %390 = vmatprep.mubr.bf16.mxu0 0
        %391 = vmatmul.mubr.bf16.gmra.mxu0 %v331
        %v392 = vpop.f32.mrf.mxu0
        %v393 = vadd.f32 %v286, %v392
        %v394 = vpop.f32.mrf.mxu0
        %v395 = vpop.f32.mrf.mxu0
        %v396 = vadd.f32 %v286, %v395
        %v397 = vpop.f32.mrf.mxu0
        %398 = vmatprep.mubr.bf16.mxu0 0
        %399 = vmatmul.mubr.bf16.gmra.mxu0 %v334
        %v400 = vpop.f32.mrf.mxu0
        %v401 = vadd.f32 %v286, %v400
        %v402 = vpop.f32.mrf.mxu0
        %v403 = vpop.f32.mrf.mxu0
        %v404 = vadd.f32 %v286, %v403
        %v405 = vpop.f32.mrf.mxu0
        %406 = vmatprep.mubr.bf16.mxu0 0
        %407 = vmatmul.mubr.bf16.gmra.mxu0 %v337
        %v408 = vpop.f32.mrf.mxu0
        %v409 = vadd.f32 %v286, %v408
        %v410 = vpop.f32.mrf.mxu0
        %v411 = vpop.f32.mrf.mxu0
        %v412 = vadd.f32 %v286, %v411
        %v413 = vpop.f32.mrf.mxu0
        %414 = vmatprep.mubr.bf16.mxu0 0
        %415 = vmatmul.mubr.bf16.gmra.mxu0 %v340
        %v416 = vpop.f32.mrf.mxu0
        %v417 = vadd.f32 %v286, %v416
        %v418 = vpop.f32.mrf.mxu0
        %v419 = vpop.f32.mrf.mxu0
        %v420 = vadd.f32 %v286, %v419
        %v421 = vpop.f32.mrf.mxu0
        %422 = vdwg.mxu0
        %v423 = vpack.c.bf16 %v380, %v377
        %v424 = vpack.c.bf16 %v388, %v385
        %v425 = vpack.c.bf16 %v396, %v393
        %v426 = vpack.c.bf16 %v404, %v401
        %v427 = vpack.c.bf16 %v412, %v409
        %v428 = vpack.c.bf16 %v420, %v417
        %v429 = vld [vmem:[%s3 + $0x10] sm:$0xf]
        %v430 = vld [vmem:[%s3 + $0x14] sm:$0xf]
        %v431 = vld [vmem:[%s3 + $0x18] sm:$0xf]
        %v432 = vld [vmem:[%s3 + $0x1c] sm:$0xf]
        %v433 = vld [vmem:[%s3 + $0x20] sm:$0xf]
        %v434 = vld [vmem:[%s3 + $0x24] sm:$0xf]
        %v435 = vld [vmem:[%s3 + $0x28] sm:$0xf]
        %v436 = vld [vmem:[%s3 + $0x2c] sm:$0xf]
        %v445 = vunpack.c.l.b16 %v429
        %v446 = vunpack.c.l.b16 %v430
        %v447 = vunpack.c.l.b16 %v431
        %v448 = vunpack.c.l.b16 %v432
        %v449 = vunpack.c.l.b16 %v433
        %v450 = vunpack.c.l.b16 %v434
        %v451 = vunpack.c.l.b16 %v435
        %v452 = vunpack.c.l.b16 %v436
        %v453 = vpack.c.b16 %v446, %v445
        %v454 = vpack.c.b16 %v448, %v447
        %v455 = vpack.c.b16 %v450, %v449
        %v456 = vpack.c.b16 %v452, %v451
        %vm461 = vcmask 523264
        %v463 = vsel %vm461, %v423, 0
        %v466 = vsel %vm461, %v424, 0
        %v469 = vsel %vm461, %v425, 0
        %v472 = vsel %vm461, %v426, 0
        %v475 = vsel %vm461, %v427, 0
        %v478 = vsel %vm461, %v428, 0
        %480 = vmatprep.subr.bf16.mxu0 0
        %481 = vmatpush1.bf16.msra.mxu0 0
        %482 = vmatprep.subr.bf16.mxu0 0
        %483 = vmatpush1.bf16.msra.mxu0 0
        %484 = vmatprep.subr.bf16.mxu0 0
        %485 = vmatpush1.bf16.msra.mxu0 0
        %486 = vmatprep.subr.bf16.mxu0 0
        %487 = vmatpush1.bf16.msra.mxu0 0
        %488 = vmatprep.subr.bf16.mxu0 0
        %489 = vmatpush1.bf16.msra.mxu0 %v456
        %490 = vmatprep.subr.bf16.mxu0 0
        %491 = vmatpush1.bf16.msra.mxu0 %v455
        %492 = vmatprep.subr.bf16.mxu0 0
        %493 = vmatpush1.bf16.msra.mxu0 %v454
        %494 = vmatprep.subr.bf16.mxu0 0
        %495 = vmatpush1.bf16.msra.mxu0 %v453
        %496 = vmatprep.subr.bf16.mxu0 0
        %497 = vmatpush2.bf16.msra.mxu0 0
        %498 = vmatprep.subr.bf16.mxu0 0
        %499 = vmatpush2.bf16.msra.mxu0 0
        %500 = vmatprep.subr.bf16.mxu0 0
        %501 = vmatpush2.bf16.msra.mxu0 0
        %502 = vmatprep.subr.bf16.mxu0 0
        %503 = vmatpush2.bf16.msra.mxu0 0
        %504 = vmatprep.subr.bf16.mxu0 0
        %505 = vmatpush2.bf16.msra.mxu0 0
        %506 = vmatprep.subr.bf16.mxu0 0
        %507 = vmatpush2.bf16.msra.mxu0 0
        %508 = vmatprep.subr.bf16.mxu0 0
        %509 = vmatpush2.bf16.msra.mxu0 0
        %510 = vmatprep.subr.bf16.mxu0 0
        %511 = vmatpush2.bf16.msra.mxu0 0
        %512 = vmatprep.mubr.bf16.mxu0 0
        %513 = vmatmul.mubr.bf16.gmra.mxu0 %v463
        %v514 = vpop.f32.mrf.mxu0
        %v515 = vadd.f32 0.0, %v514
        %v516 = vpop.f32.mrf.mxu0
        %v517 = vpop.f32.mrf.mxu0
        %v518 = vadd.f32 0.0, %v517
        %v519 = vpop.f32.mrf.mxu0
        %520 = vmatprep.mubr.bf16.mxu0 0
        %521 = vmatmul.mubr.bf16.gmra.mxu0 %v466
        %v522 = vpop.f32.mrf.mxu0
        %v523 = vadd.f32 0.0, %v522
        %v524 = vpop.f32.mrf.mxu0
        %v525 = vpop.f32.mrf.mxu0
        %v526 = vadd.f32 0.0, %v525
        %v527 = vpop.f32.mrf.mxu0
        %528 = vmatprep.mubr.bf16.mxu0 0
        %529 = vmatmul.mubr.bf16.gmra.mxu0 %v469
        %v530 = vpop.f32.mrf.mxu0
        %v531 = vadd.f32 0.0, %v530
        %v532 = vpop.f32.mrf.mxu0
        %v533 = vpop.f32.mrf.mxu0
        %v534 = vadd.f32 0.0, %v533
        %v535 = vpop.f32.mrf.mxu0
        %536 = vmatprep.mubr.bf16.mxu0 0
        %537 = vmatmul.mubr.bf16.gmra.mxu0 %v472
        %v538 = vpop.f32.mrf.mxu0
        %v539 = vadd.f32 0.0, %v538
        %v540 = vpop.f32.mrf.mxu0
        %v541 = vpop.f32.mrf.mxu0
        %v542 = vadd.f32 0.0, %v541
        %v543 = vpop.f32.mrf.mxu0
        %544 = vmatprep.mubr.bf16.mxu0 0
        %545 = vmatmul.mubr.bf16.gmra.mxu0 %v475
        %v546 = vpop.f32.mrf.mxu0
        %v547 = vadd.f32 0.0, %v546
        %v548 = vpop.f32.mrf.mxu0
        %v549 = vpop.f32.mrf.mxu0
        %v550 = vadd.f32 0.0, %v549
        %v551 = vpop.f32.mrf.mxu0
        %552 = vmatprep.mubr.bf16.mxu0 0
        %553 = vmatmul.mubr.bf16.gmra.mxu0 %v478
        %v554 = vpop.f32.mrf.mxu0
        %v555 = vadd.f32 0.0, %v554
        %v556 = vpop.f32.mrf.mxu0
        %v557 = vpop.f32.mrf.mxu0
        %v558 = vadd.f32 0.0, %v557
        %v559 = vpop.f32.mrf.mxu0
        %560 = vdwg.mxu0
        %v561 = vpack.c.bf16 %v518, %v515
        %v562 = vpack.c.bf16 %v526, %v523
        %v563 = vpack.c.bf16 %v534, %v531
        %v564 = vpack.c.bf16 %v542, %v539
        %v565 = vpack.c.bf16 %v550, %v547
        %v566 = vpack.c.bf16 %v558, %v555
        %v567 = vlaneseq
        %v568 = vshrl.u32 %v567, 7
        %v569 = vsub.s32 1, %v568
        %v570 = vrot.slane %v280, %v569
        %v583 = vunpack.c.l.b16 %v266
        %v584 = vunpack.c.l.b16 %v267
        %v585 = vunpack.c.l.b16 %v268
        %v586 = vunpack.c.l.b16 %v269
        %v587 = vunpack.c.l.b16 %v270
        %v588 = vunpack.c.l.b16 %v271
        %v589 = vunpack.c.l.b16 %v272
        %v590 = vunpack.c.l.b16 %v273
        %v591 = vunpack.c.l.b16 %v274
        %v592 = vunpack.c.l.b16 %v275
        %v593 = vunpack.c.l.b16 %v276
        %v594 = vunpack.c.l.b16 %v277
        %v595 = vpack.c.b16 %v584, %v583
        %v596 = vpack.c.b16 %v586, %v585
        %v597 = vpack.c.b16 %v588, %v587
        %v598 = vpack.c.b16 %v590, %v589
        %v599 = vpack.c.b16 %v592, %v591
        %v600 = vpack.c.b16 %v594, %v593
        %vm601 = vcmask 785408
        %v603 = vsel %vm601, %v595, 0
        %v606 = vsel %vm601, %v596, 0
        %v609 = vsel %vm601, %v597, 0
        %v612 = vsel %vm601, %v598, 0
        %v615 = vsel %vm601, %v599, 0
        %v618 = vsel %vm601, %v600, 0
        %620 = vmatprep.subr.bf16.mxu0 0
        %621 = vmatpush1.bf16.msra.mxu0 0
        %622 = vmatprep.subr.bf16.mxu0 0
        %623 = vmatpush1.bf16.msra.mxu0 0
        %624 = vmatprep.subr.bf16.mxu0 0
        %625 = vmatpush1.bf16.msra.mxu0 %v566
        %626 = vmatprep.subr.bf16.mxu0 0
        %627 = vmatpush1.bf16.msra.mxu0 %v565
        %628 = vmatprep.subr.bf16.mxu0 0
        %629 = vmatpush1.bf16.msra.mxu0 %v564
        %630 = vmatprep.subr.bf16.mxu0 0
        %631 = vmatpush1.bf16.msra.mxu0 %v563
        %632 = vmatprep.subr.bf16.mxu0 0
        %633 = vmatpush1.bf16.msra.mxu0 %v562
        %634 = vmatprep.subr.bf16.mxu0 0
        %635 = vmatpush1.bf16.msra.mxu0 %v561
        %636 = vmatprep.subr.bf16.mxu0 0
        %637 = vmatpush2.bf16.msra.mxu0 0
        %638 = vmatprep.subr.bf16.mxu0 0
        %639 = vmatpush2.bf16.msra.mxu0 0
        %640 = vmatprep.subr.bf16.mxu0 0
        %641 = vmatpush2.bf16.msra.mxu0 0
        %642 = vmatprep.subr.bf16.mxu0 0
        %643 = vmatpush2.bf16.msra.mxu0 0
        %644 = vmatprep.subr.bf16.mxu0 0
        %645 = vmatpush2.bf16.msra.mxu0 0
        %646 = vmatprep.subr.bf16.mxu0 0
        %647 = vmatpush2.bf16.msra.mxu0 0
        %648 = vmatprep.subr.bf16.mxu0 0
        %649 = vmatpush2.bf16.msra.mxu0 0
        %650 = vmatprep.subr.bf16.mxu0 0
        %651 = vmatpush2.bf16.msra.mxu0 0
        %652 = vmatprep.mubr.bf16.mxu0 0
        %653 = vmatmul.mubr.bf16.gmra.mxu0 %v603
        %v654 = vpop.f32.mrf.mxu0
        %v655 = vadd.f32 %v570, %v654
        %v656 = vpop.f32.mrf.mxu0
        %v657 = vpop.f32.mrf.mxu0
        %v658 = vadd.f32 %v570, %v657
        %v659 = vpop.f32.mrf.mxu0
        %660 = vmatprep.mubr.bf16.mxu0 0
        %661 = vmatmul.mubr.bf16.gmra.mxu0 %v606
        %v662 = vpop.f32.mrf.mxu0
        %v663 = vadd.f32 %v570, %v662
        %v664 = vpop.f32.mrf.mxu0
        %v665 = vpop.f32.mrf.mxu0
        %v666 = vadd.f32 %v570, %v665
        %v667 = vpop.f32.mrf.mxu0
        %668 = vmatprep.mubr.bf16.mxu0 0
        %669 = vmatmul.mubr.bf16.gmra.mxu0 %v609
        %v670 = vpop.f32.mrf.mxu0
        %v671 = vadd.f32 %v570, %v670
        %v672 = vpop.f32.mrf.mxu0
        %v673 = vpop.f32.mrf.mxu0
        %v674 = vadd.f32 %v570, %v673
        %v675 = vpop.f32.mrf.mxu0
        %676 = vmatprep.mubr.bf16.mxu0 0
        %677 = vmatmul.mubr.bf16.gmra.mxu0 %v612
        %v678 = vpop.f32.mrf.mxu0
        %v679 = vadd.f32 %v570, %v678
        %v680 = vpop.f32.mrf.mxu0
        %v681 = vpop.f32.mrf.mxu0
        %v682 = vadd.f32 %v570, %v681
        %v683 = vpop.f32.mrf.mxu0
        %684 = vmatprep.mubr.bf16.mxu0 0
        %685 = vmatmul.mubr.bf16.gmra.mxu0 %v615
        %v686 = vpop.f32.mrf.mxu0
        %v687 = vadd.f32 %v570, %v686
        %v688 = vpop.f32.mrf.mxu0
        %v689 = vpop.f32.mrf.mxu0
        %v690 = vadd.f32 %v570, %v689
        %v691 = vpop.f32.mrf.mxu0
        %692 = vmatprep.mubr.bf16.mxu0 0
        %693 = vmatmul.mubr.bf16.gmra.mxu0 %v618
        %v694 = vpop.f32.mrf.mxu0
        %v695 = vadd.f32 %v570, %v694
        %v696 = vpop.f32.mrf.mxu0
        %v697 = vpop.f32.mrf.mxu0
        %v698 = vadd.f32 %v570, %v697
        %v699 = vpop.f32.mrf.mxu0
        %700 = vdwg.mxu0
        %v701 = vmax.f32 %v655, 0.0
        %v702 = vmax.f32 %v658, 0.0
        %v703 = vmax.f32 %v663, 0.0
        %v704 = vmax.f32 %v666, 0.0
        %v705 = vmax.f32 %v671, 0.0
        %v706 = vmax.f32 %v674, 0.0
        %v707 = vmax.f32 %v679, 0.0
        %v708 = vmax.f32 %v682, 0.0
        %v709 = vmax.f32 %v687, 0.0
        %v710 = vmax.f32 %v690, 0.0
        %v711 = vmax.f32 %v695, 0.0
        %v712 = vmax.f32 %v698, 0.0
        %v713 = vld [vmem:[%s3 + $0x30] sm:$0xf]
        %v714 = vld [vmem:[%s3 + $0x34] sm:$0xf]
        %v715 = vld [vmem:[%s3 + $0x38] sm:$0xf]
        %v716 = vld [vmem:[%s3 + $0x3c] sm:$0xf]
        %v717 = vld [vmem:[%s3 + $0x40] sm:$0xf]
        %v718 = vld [vmem:[%s3 + $0x44] sm:$0xf]
        %v719 = vld [vmem:[%s3 + $0x48] sm:$0xf]
        %v720 = vld [vmem:[%s3 + $0x4c] sm:$0xf]
        %v721 = vpack.c.bf16 %v702, %v701
        %v722 = vpack.c.bf16 %v704, %v703
        %v723 = vpack.c.bf16 %v706, %v705
        %v724 = vpack.c.bf16 %v708, %v707
        %v725 = vpack.c.bf16 %v710, %v709
        %v726 = vpack.c.bf16 %v712, %v711
        %v735 = vunpack.c.l.b16 %v713
        %v736 = vunpack.c.l.b16 %v714
        %v737 = vunpack.c.l.b16 %v715
        %v738 = vunpack.c.l.b16 %v716
        %v739 = vunpack.c.l.b16 %v717
        %v740 = vunpack.c.l.b16 %v718
        %v741 = vunpack.c.l.b16 %v719
        %v742 = vunpack.c.l.b16 %v720
        %v743 = vpack.c.b16 %v736, %v735
        %v744 = vpack.c.b16 %v738, %v737
        %v745 = vpack.c.b16 %v740, %v739
        %v746 = vpack.c.b16 %v742, %v741
        %v752 = vsel %vm461, %v721, 0
        %v755 = vsel %vm461, %v722, 0
        %v758 = vsel %vm461, %v723, 0
        %v761 = vsel %vm461, %v724, 0
        %v764 = vsel %vm461, %v725, 0
        %v767 = vsel %vm461, %v726, 0
        %769 = vmatprep.subr.bf16.mxu0 0
        %770 = vmatpush1.bf16.msra.mxu0 0
        %771 = vmatprep.subr.bf16.mxu0 0
        %772 = vmatpush1.bf16.msra.mxu0 0
        %773 = vmatprep.subr.bf16.mxu0 0
        %774 = vmatpush1.bf16.msra.mxu0 0
        %775 = vmatprep.subr.bf16.mxu0 0
        %776 = vmatpush1.bf16.msra.mxu0 0
        %777 = vmatprep.subr.bf16.mxu0 0
        %778 = vmatpush1.bf16.msra.mxu0 %v746
        %779 = vmatprep.subr.bf16.mxu0 0
        %780 = vmatpush1.bf16.msra.mxu0 %v745
        %781 = vmatprep.subr.bf16.mxu0 0
        %782 = vmatpush1.bf16.msra.mxu0 %v744
        %783 = vmatprep.subr.bf16.mxu0 0
        %784 = vmatpush1.bf16.msra.mxu0 %v743
        %785 = vmatprep.subr.bf16.mxu0 0
        %786 = vmatpush2.bf16.msra.mxu0 0
        %787 = vmatprep.subr.bf16.mxu0 0
        %788 = vmatpush2.bf16.msra.mxu0 0
        %789 = vmatprep.subr.bf16.mxu0 0
        %790 = vmatpush2.bf16.msra.mxu0 0
        %791 = vmatprep.subr.bf16.mxu0 0
        %792 = vmatpush2.bf16.msra.mxu0 0
        %793 = vmatprep.subr.bf16.mxu0 0
        %794 = vmatpush2.bf16.msra.mxu0 0
        %795 = vmatprep.subr.bf16.mxu0 0
        %796 = vmatpush2.bf16.msra.mxu0 0
        %797 = vmatprep.subr.bf16.mxu0 0
        %798 = vmatpush2.bf16.msra.mxu0 0
        %799 = vmatprep.subr.bf16.mxu0 0
        %800 = vmatpush2.bf16.msra.mxu0 0
        %801 = vmatprep.mubr.bf16.mxu0 0
        %802 = vmatmul.mubr.bf16.gmra.mxu0 %v752
        %v803 = vpop.f32.mrf.mxu0
        %v804 = vadd.f32 0.0, %v803
        %v805 = vpop.f32.mrf.mxu0
        %v806 = vpop.f32.mrf.mxu0
        %v807 = vadd.f32 0.0, %v806
        %v808 = vpop.f32.mrf.mxu0
        %809 = vmatprep.mubr.bf16.mxu0 0
        %810 = vmatmul.mubr.bf16.gmra.mxu0 %v755
        %v811 = vpop.f32.mrf.mxu0
        %v812 = vadd.f32 0.0, %v811
        %v813 = vpop.f32.mrf.mxu0
        %v814 = vpop.f32.mrf.mxu0
        %v815 = vadd.f32 0.0, %v814
        %v816 = vpop.f32.mrf.mxu0
        %817 = vmatprep.mubr.bf16.mxu0 0
        %818 = vmatmul.mubr.bf16.gmra.mxu0 %v758
        %v819 = vpop.f32.mrf.mxu0
        %v820 = vadd.f32 0.0, %v819
        %v821 = vpop.f32.mrf.mxu0
        %v822 = vpop.f32.mrf.mxu0
        %v823 = vadd.f32 0.0, %v822
        %v824 = vpop.f32.mrf.mxu0
        %825 = vmatprep.mubr.bf16.mxu0 0
        %826 = vmatmul.mubr.bf16.gmra.mxu0 %v761
        %v827 = vpop.f32.mrf.mxu0
        %v828 = vadd.f32 0.0, %v827
        %v829 = vpop.f32.mrf.mxu0
        %v830 = vpop.f32.mrf.mxu0
        %v831 = vadd.f32 0.0, %v830
        %v832 = vpop.f32.mrf.mxu0
        %833 = vmatprep.mubr.bf16.mxu0 0
        %834 = vmatmul.mubr.bf16.gmra.mxu0 %v764
        %v835 = vpop.f32.mrf.mxu0
        %v836 = vadd.f32 0.0, %v835
        %v837 = vpop.f32.mrf.mxu0
        %v838 = vpop.f32.mrf.mxu0
        %v839 = vadd.f32 0.0, %v838
        %v840 = vpop.f32.mrf.mxu0
        %841 = vmatprep.mubr.bf16.mxu0 0
        %842 = vmatmul.mubr.bf16.gmra.mxu0 %v767
        %v843 = vpop.f32.mrf.mxu0
        %v844 = vadd.f32 0.0, %v843
        %v845 = vpop.f32.mrf.mxu0
        %v846 = vpop.f32.mrf.mxu0
        %v847 = vadd.f32 0.0, %v846
        %v848 = vpop.f32.mrf.mxu0
        %849 = vdwg.mxu0
        %v850 = vadd.f32 %v804, 0.0
        %v851 = vadd.f32 %v807, 0.0
        %v852 = vadd.f32 %v812, 0.0
        %v853 = vadd.f32 %v815, 0.0
        %v854 = vadd.f32 %v820, 0.0
        %v855 = vadd.f32 %v823, 0.0
        %v856 = vadd.f32 %v828, 0.0
        %v857 = vadd.f32 %v831, 0.0
        %v858 = vadd.f32 %v836, 0.0
        %v859 = vadd.f32 %v839, 0.0
        %v860 = vadd.f32 %v844, 0.0
        %v861 = vadd.f32 %v847, 0.0
        %v862 = vpack.c.bf16 %v807, %v804
        %v863 = vpack.c.bf16 %v815, %v812
        %v864 = vpack.c.bf16 %v823, %v820
        %v865 = vpack.c.bf16 %v831, %v828
        %v866 = vpack.c.bf16 %v839, %v836
        %v867 = vpack.c.bf16 %v847, %v844
        %v868 = vlaneseq
        %v869 = vshrl.u32 %v868, 7
        %v870 = vsub.s32 2, %v869
        %v871 = vrot.slane %v280, %v870
        %872 = vmatprep.subr.bf16.mxu0 0
        %873 = vmatpush1.bf16.msra.mxu0 0
        %874 = vmatprep.subr.bf16.mxu0 0
        %875 = vmatpush1.bf16.msra.mxu0 0
        %876 = vmatprep.subr.bf16.mxu0 0
        %877 = vmatpush1.bf16.msra.mxu0 %v867
        %878 = vmatprep.subr.bf16.mxu0 0
        %879 = vmatpush1.bf16.msra.mxu0 %v866
        %880 = vmatprep.subr.bf16.mxu0 0
        %881 = vmatpush1.bf16.msra.mxu0 %v865
        %882 = vmatprep.subr.bf16.mxu0 0
        %883 = vmatpush1.bf16.msra.mxu0 %v864
        %884 = vmatprep.subr.bf16.mxu0 0
        %885 = vmatpush1.bf16.msra.mxu0 %v863
        %886 = vmatprep.subr.bf16.mxu0 0
        %887 = vmatpush1.bf16.msra.mxu0 %v862
        %888 = vmatprep.subr.bf16.mxu0 0
        %889 = vmatpush2.bf16.msra.mxu0 0
        %890 = vmatprep.subr.bf16.mxu0 0
        %891 = vmatpush2.bf16.msra.mxu0 0
        %892 = vmatprep.subr.bf16.mxu0 0
        %893 = vmatpush2.bf16.msra.mxu0 0
        %894 = vmatprep.subr.bf16.mxu0 0
        %895 = vmatpush2.bf16.msra.mxu0 0
        %896 = vmatprep.subr.bf16.mxu0 0
        %897 = vmatpush2.bf16.msra.mxu0 0
        %898 = vmatprep.subr.bf16.mxu0 0
        %899 = vmatpush2.bf16.msra.mxu0 0
        %900 = vmatprep.subr.bf16.mxu0 0
        %901 = vmatpush2.bf16.msra.mxu0 0
        %902 = vmatprep.subr.bf16.mxu0 0
        %903 = vmatpush2.bf16.msra.mxu0 0
        %904 = vmatprep.mubr.bf16.mxu0 0
        %905 = vmatmul.mubr.bf16.gmra.mxu0 %v603
        %v906 = vpop.f32.mrf.mxu0
        %v907 = vadd.f32 %v871, %v906
        %v908 = vpop.f32.mrf.mxu0
        %v909 = vpop.f32.mrf.mxu0
        %v910 = vadd.f32 %v871, %v909
        %v911 = vpop.f32.mrf.mxu0
        %912 = vmatprep.mubr.bf16.mxu0 0
        %913 = vmatmul.mubr.bf16.gmra.mxu0 %v606
        %v914 = vpop.f32.mrf.mxu0
        %v915 = vadd.f32 %v871, %v914
        %v916 = vpop.f32.mrf.mxu0
        %v917 = vpop.f32.mrf.mxu0
        %v918 = vadd.f32 %v871, %v917
        %v919 = vpop.f32.mrf.mxu0
        %920 = vmatprep.mubr.bf16.mxu0 0
        %921 = vmatmul.mubr.bf16.gmra.mxu0 %v609
        %v922 = vpop.f32.mrf.mxu0
        %v923 = vadd.f32 %v871, %v922
        %v924 = vpop.f32.mrf.mxu0
        %v925 = vpop.f32.mrf.mxu0
        %v926 = vadd.f32 %v871, %v925
        %v927 = vpop.f32.mrf.mxu0
        %928 = vmatprep.mubr.bf16.mxu0 0
        %929 = vmatmul.mubr.bf16.gmra.mxu0 %v612
        %v930 = vpop.f32.mrf.mxu0
        %v931 = vadd.f32 %v871, %v930
        %v932 = vpop.f32.mrf.mxu0
        %v933 = vpop.f32.mrf.mxu0
        %v934 = vadd.f32 %v871, %v933
        %v935 = vpop.f32.mrf.mxu0
        %936 = vmatprep.mubr.bf16.mxu0 0
        %937 = vmatmul.mubr.bf16.gmra.mxu0 %v615
        %v938 = vpop.f32.mrf.mxu0
        %v939 = vadd.f32 %v871, %v938
        %v940 = vpop.f32.mrf.mxu0
        %v941 = vpop.f32.mrf.mxu0
        %v942 = vadd.f32 %v871, %v941
        %v943 = vpop.f32.mrf.mxu0
        %944 = vmatprep.mubr.bf16.mxu0 0
        %945 = vmatmul.mubr.bf16.gmra.mxu0 %v618
        %v946 = vpop.f32.mrf.mxu0
        %v947 = vadd.f32 %v871, %v946
        %v948 = vpop.f32.mrf.mxu0
        %v949 = vpop.f32.mrf.mxu0
        %v950 = vadd.f32 %v871, %v949
        %v951 = vpop.f32.mrf.mxu0
        %952 = vdwg.mxu0
        %v953 = vmax.f32 %v907, 0.0
        %v954 = vmax.f32 %v910, 0.0
        %v955 = vmax.f32 %v915, 0.0
        %v956 = vmax.f32 %v918, 0.0
        %v957 = vmax.f32 %v923, 0.0
        %v958 = vmax.f32 %v926, 0.0
        %v959 = vmax.f32 %v931, 0.0
        %v960 = vmax.f32 %v934, 0.0
        %v961 = vmax.f32 %v939, 0.0
        %v962 = vmax.f32 %v942, 0.0
        %v963 = vmax.f32 %v947, 0.0
        %v964 = vmax.f32 %v950, 0.0
        %v965 = vld [vmem:[%s3 + $0x50] sm:$0xf]
        %v966 = vld [vmem:[%s3 + $0x54] sm:$0xf]
        %v967 = vld [vmem:[%s3 + $0x58] sm:$0xf]
        %v968 = vld [vmem:[%s3 + $0x5c] sm:$0xf]
        %v969 = vld [vmem:[%s3 + $0x60] sm:$0xf]
        %v970 = vld [vmem:[%s3 + $0x64] sm:$0xf]
        %v971 = vld [vmem:[%s3 + $0x68] sm:$0xf]
        %v972 = vld [vmem:[%s3 + $0x6c] sm:$0xf]
        %v973 = vpack.c.bf16 %v954, %v953
        %v974 = vpack.c.bf16 %v956, %v955
        %v975 = vpack.c.bf16 %v958, %v957
        %v976 = vpack.c.bf16 %v960, %v959
        %v977 = vpack.c.bf16 %v962, %v961
        %v978 = vpack.c.bf16 %v964, %v963
        %v987 = vunpack.c.l.b16 %v965
        %v988 = vunpack.c.l.b16 %v966
        %v989 = vunpack.c.l.b16 %v967
        %v990 = vunpack.c.l.b16 %v968
        %v991 = vunpack.c.l.b16 %v969
        %v992 = vunpack.c.l.b16 %v970
        %v993 = vunpack.c.l.b16 %v971
        %v994 = vunpack.c.l.b16 %v972
        %v995 = vpack.c.b16 %v988, %v987
        %v996 = vpack.c.b16 %v990, %v989
        %v997 = vpack.c.b16 %v992, %v991
        %v998 = vpack.c.b16 %v994, %v993
        %v1004 = vsel %vm461, %v973, 0
        %v1007 = vsel %vm461, %v974, 0
        %v1010 = vsel %vm461, %v975, 0
        %v1013 = vsel %vm461, %v976, 0
        %v1016 = vsel %vm461, %v977, 0
        %v1019 = vsel %vm461, %v978, 0
        %1021 = vmatprep.subr.bf16.mxu0 0
        %1022 = vmatpush1.bf16.msra.mxu0 0
        %1023 = vmatprep.subr.bf16.mxu0 0
        %1024 = vmatpush1.bf16.msra.mxu0 0
        %1025 = vmatprep.subr.bf16.mxu0 0
        %1026 = vmatpush1.bf16.msra.mxu0 0
        %1027 = vmatprep.subr.bf16.mxu0 0
        %1028 = vmatpush1.bf16.msra.mxu0 0
        %1029 = vmatprep.subr.bf16.mxu0 0
        %1030 = vmatpush1.bf16.msra.mxu0 %v998
        %1031 = vmatprep.subr.bf16.mxu0 0
        %1032 = vmatpush1.bf16.msra.mxu0 %v997
        %1033 = vmatprep.subr.bf16.mxu0 0
        %1034 = vmatpush1.bf16.msra.mxu0 %v996
        %1035 = vmatprep.subr.bf16.mxu0 0
        %1036 = vmatpush1.bf16.msra.mxu0 %v995
        %1037 = vmatprep.subr.bf16.mxu0 0
        %1038 = vmatpush2.bf16.msra.mxu0 0
        %1039 = vmatprep.subr.bf16.mxu0 0
        %1040 = vmatpush2.bf16.msra.mxu0 0
        %1041 = vmatprep.subr.bf16.mxu0 0
        %1042 = vmatpush2.bf16.msra.mxu0 0
        %1043 = vmatprep.subr.bf16.mxu0 0
        %1044 = vmatpush2.bf16.msra.mxu0 0
        %1045 = vmatprep.subr.bf16.mxu0 0
        %1046 = vmatpush2.bf16.msra.mxu0 0
        %1047 = vmatprep.subr.bf16.mxu0 0
        %1048 = vmatpush2.bf16.msra.mxu0 0
        %1049 = vmatprep.subr.bf16.mxu0 0
        %1050 = vmatpush2.bf16.msra.mxu0 0
        %1051 = vmatprep.subr.bf16.mxu0 0
        %1052 = vmatpush2.bf16.msra.mxu0 0
        %1053 = vmatprep.mubr.bf16.mxu0 0
        %1054 = vmatmul.mubr.bf16.gmra.mxu0 %v1004
        %v1055 = vpop.f32.mrf.mxu0
        %v1056 = vadd.f32 0.0, %v1055
        %v1057 = vpop.f32.mrf.mxu0
        %v1058 = vpop.f32.mrf.mxu0
        %v1059 = vadd.f32 0.0, %v1058
        %v1060 = vpop.f32.mrf.mxu0
        %1061 = vmatprep.mubr.bf16.mxu0 0
        %1062 = vmatmul.mubr.bf16.gmra.mxu0 %v1007
        %v1063 = vpop.f32.mrf.mxu0
        %v1064 = vadd.f32 0.0, %v1063
        %v1065 = vpop.f32.mrf.mxu0
        %v1066 = vpop.f32.mrf.mxu0
        %v1067 = vadd.f32 0.0, %v1066
        %v1068 = vpop.f32.mrf.mxu0
        %1069 = vmatprep.mubr.bf16.mxu0 0
        %1070 = vmatmul.mubr.bf16.gmra.mxu0 %v1010
        %v1071 = vpop.f32.mrf.mxu0
        %v1072 = vadd.f32 0.0, %v1071
        %v1073 = vpop.f32.mrf.mxu0
        %v1074 = vpop.f32.mrf.mxu0
        %v1075 = vadd.f32 0.0, %v1074
        %v1076 = vpop.f32.mrf.mxu0
        %1077 = vmatprep.mubr.bf16.mxu0 0
        %1078 = vmatmul.mubr.bf16.gmra.mxu0 %v1013
        %v1079 = vpop.f32.mrf.mxu0
        %v1080 = vadd.f32 0.0, %v1079
        %v1081 = vpop.f32.mrf.mxu0
        %v1082 = vpop.f32.mrf.mxu0
        %v1083 = vadd.f32 0.0, %v1082
        %v1084 = vpop.f32.mrf.mxu0
        %1085 = vmatprep.mubr.bf16.mxu0 0
        %1086 = vmatmul.mubr.bf16.gmra.mxu0 %v1016
        %v1087 = vpop.f32.mrf.mxu0
        %v1088 = vadd.f32 0.0, %v1087
        %v1089 = vpop.f32.mrf.mxu0
        %v1090 = vpop.f32.mrf.mxu0
        %v1091 = vadd.f32 0.0, %v1090
        %v1092 = vpop.f32.mrf.mxu0
        %1093 = vmatprep.mubr.bf16.mxu0 0
        %1094 = vmatmul.mubr.bf16.gmra.mxu0 %v1019
        %v1095 = vpop.f32.mrf.mxu0
        %v1096 = vadd.f32 0.0, %v1095
        %v1097 = vpop.f32.mrf.mxu0
        %v1098 = vpop.f32.mrf.mxu0
        %v1099 = vadd.f32 0.0, %v1098
        %v1100 = vpop.f32.mrf.mxu0
        %1101 = vdwg.mxu0
        %v1102 = vadd.f32 %v850, %v1056
        %v1103 = vadd.f32 %v851, %v1059
        %v1104 = vadd.f32 %v852, %v1064
        %v1105 = vadd.f32 %v853, %v1067
        %v1106 = vadd.f32 %v854, %v1072
        %v1107 = vadd.f32 %v855, %v1075
        %v1108 = vadd.f32 %v856, %v1080
        %v1109 = vadd.f32 %v857, %v1083
        %v1110 = vadd.f32 %v858, %v1088
        %v1111 = vadd.f32 %v859, %v1091
        %v1112 = vadd.f32 %v860, %v1096
        %v1113 = vadd.f32 %v861, %v1099
        %v1114 = vpack.c.bf16 %v1059, %v1056
        %v1115 = vpack.c.bf16 %v1067, %v1064
        %v1116 = vpack.c.bf16 %v1075, %v1072
        %v1117 = vpack.c.bf16 %v1083, %v1080
        %v1118 = vpack.c.bf16 %v1091, %v1088
        %v1119 = vpack.c.bf16 %v1099, %v1096
        %v1120 = vlaneseq
        %v1121 = vshrl.u32 %v1120, 7
        %v1122 = vsub.s32 3, %v1121
        %v1123 = vrot.slane %v280, %v1122
        %1124 = vmatprep.subr.bf16.mxu0 0
        %1125 = vmatpush1.bf16.msra.mxu0 0
        %1126 = vmatprep.subr.bf16.mxu0 0
        %1127 = vmatpush1.bf16.msra.mxu0 0
        %1128 = vmatprep.subr.bf16.mxu0 0
        %1129 = vmatpush1.bf16.msra.mxu0 %v1119
        %1130 = vmatprep.subr.bf16.mxu0 0
        %1131 = vmatpush1.bf16.msra.mxu0 %v1118
        %1132 = vmatprep.subr.bf16.mxu0 0
        %1133 = vmatpush1.bf16.msra.mxu0 %v1117
        %1134 = vmatprep.subr.bf16.mxu0 0
        %1135 = vmatpush1.bf16.msra.mxu0 %v1116
        %1136 = vmatprep.subr.bf16.mxu0 0
        %1137 = vmatpush1.bf16.msra.mxu0 %v1115
        %1138 = vmatprep.subr.bf16.mxu0 0
        %1139 = vmatpush1.bf16.msra.mxu0 %v1114
        %1140 = vmatprep.subr.bf16.mxu0 0
        %1141 = vmatpush2.bf16.msra.mxu0 0
        %1142 = vmatprep.subr.bf16.mxu0 0
        %1143 = vmatpush2.bf16.msra.mxu0 0
        %1144 = vmatprep.subr.bf16.mxu0 0
        %1145 = vmatpush2.bf16.msra.mxu0 0
        %1146 = vmatprep.subr.bf16.mxu0 0
        %1147 = vmatpush2.bf16.msra.mxu0 0
        %1148 = vmatprep.subr.bf16.mxu0 0
        %1149 = vmatpush2.bf16.msra.mxu0 0
        %1150 = vmatprep.subr.bf16.mxu0 0
        %1151 = vmatpush2.bf16.msra.mxu0 0
        %1152 = vmatprep.subr.bf16.mxu0 0
        %1153 = vmatpush2.bf16.msra.mxu0 0
        %1154 = vmatprep.subr.bf16.mxu0 0
        %1155 = vmatpush2.bf16.msra.mxu0 0
        %1156 = vmatprep.mubr.bf16.mxu0 0
        %1157 = vmatmul.mubr.bf16.gmra.mxu0 %v603
        %v1158 = vpop.f32.mrf.mxu0
        %v1159 = vadd.f32 %v1123, %v1158
        %v1160 = vpop.f32.mrf.mxu0
        %v1161 = vpop.f32.mrf.mxu0
        %v1162 = vadd.f32 %v1123, %v1161
        %v1163 = vpop.f32.mrf.mxu0
        %1164 = vmatprep.mubr.bf16.mxu0 0
        %1165 = vmatmul.mubr.bf16.gmra.mxu0 %v606
        %v1166 = vpop.f32.mrf.mxu0
        %v1167 = vadd.f32 %v1123, %v1166
        %v1168 = vpop.f32.mrf.mxu0
        %v1169 = vpop.f32.mrf.mxu0
        %v1170 = vadd.f32 %v1123, %v1169
        %v1171 = vpop.f32.mrf.mxu0
        %1172 = vmatprep.mubr.bf16.mxu0 0
        %1173 = vmatmul.mubr.bf16.gmra.mxu0 %v609
        %v1174 = vpop.f32.mrf.mxu0
        %v1175 = vadd.f32 %v1123, %v1174
        %v1176 = vpop.f32.mrf.mxu0
        %v1177 = vpop.f32.mrf.mxu0
        %v1178 = vadd.f32 %v1123, %v1177
        %v1179 = vpop.f32.mrf.mxu0
        %1180 = vmatprep.mubr.bf16.mxu0 0
        %1181 = vmatmul.mubr.bf16.gmra.mxu0 %v612
        %v1182 = vpop.f32.mrf.mxu0
        %v1183 = vadd.f32 %v1123, %v1182
        %v1184 = vpop.f32.mrf.mxu0
        %v1185 = vpop.f32.mrf.mxu0
        %v1186 = vadd.f32 %v1123, %v1185
        %v1187 = vpop.f32.mrf.mxu0
        %1188 = vmatprep.mubr.bf16.mxu0 0
        %1189 = vmatmul.mubr.bf16.gmra.mxu0 %v615
        %v1190 = vpop.f32.mrf.mxu0
        %v1191 = vadd.f32 %v1123, %v1190
        %v1192 = vpop.f32.mrf.mxu0
        %v1193 = vpop.f32.mrf.mxu0
        %v1194 = vadd.f32 %v1123, %v1193
        %v1195 = vpop.f32.mrf.mxu0
        %1196 = vmatprep.mubr.bf16.mxu0 0
        %1197 = vmatmul.mubr.bf16.gmra.mxu0 %v618
        %v1198 = vpop.f32.mrf.mxu0
        %v1199 = vadd.f32 %v1123, %v1198
        %v1200 = vpop.f32.mrf.mxu0
        %v1201 = vpop.f32.mrf.mxu0
        %v1202 = vadd.f32 %v1123, %v1201
        %v1203 = vpop.f32.mrf.mxu0
        %1204 = vdwg.mxu0
        %v1205 = vmax.f32 %v1159, 0.0
        %v1206 = vmax.f32 %v1162, 0.0
        %v1207 = vmax.f32 %v1167, 0.0
        %v1208 = vmax.f32 %v1170, 0.0
        %v1209 = vmax.f32 %v1175, 0.0
        %v1210 = vmax.f32 %v1178, 0.0
        %v1211 = vmax.f32 %v1183, 0.0
        %v1212 = vmax.f32 %v1186, 0.0
        %v1213 = vmax.f32 %v1191, 0.0
        %v1214 = vmax.f32 %v1194, 0.0
        %v1215 = vmax.f32 %v1199, 0.0
        %v1216 = vmax.f32 %v1202, 0.0
        %v1217 = vpack.c.bf16 %v1206, %v1205
        %v1218 = vpack.c.bf16 %v1208, %v1207
        %v1219 = vpack.c.bf16 %v1210, %v1209
        %v1220 = vpack.c.bf16 %v1212, %v1211
        %v1221 = vpack.c.bf16 %v1214, %v1213
        %v1222 = vpack.c.bf16 %v1216, %v1215
        %v1223 = vld [vmem:[%s3 + $0x70] sm:$0xf]
        %v1224 = vld [vmem:[%s3 + $0x74] sm:$0xf]
        %v1225 = vld [vmem:[%s3 + $0x78] sm:$0xf]
        %v1226 = vld [vmem:[%s3 + $0x7c] sm:$0xf]
        %v1227 = vld [vmem:[%s3 + $0x80] sm:$0xf]
        %v1228 = vld [vmem:[%s3 + $0x84] sm:$0xf]
        %v1229 = vld [vmem:[%s3 + $0x88] sm:$0xf]
        %v1230 = vld [vmem:[%s3 + $0x8c] sm:$0xf]
        %v1239 = vunpack.c.l.b16 %v1223
        %v1240 = vunpack.c.l.b16 %v1224
        %v1241 = vunpack.c.l.b16 %v1225
        %v1242 = vunpack.c.l.b16 %v1226
        %v1243 = vunpack.c.l.b16 %v1227
        %v1244 = vunpack.c.l.b16 %v1228
        %v1245 = vunpack.c.l.b16 %v1229
        %v1246 = vunpack.c.l.b16 %v1230
        %v1247 = vpack.c.b16 %v1240, %v1239
        %v1248 = vpack.c.b16 %v1242, %v1241
        %v1249 = vpack.c.b16 %v1244, %v1243
        %v1250 = vpack.c.b16 %v1246, %v1245
        %v1256 = vsel %vm461, %v1217, 0
        %v1259 = vsel %vm461, %v1218, 0
        %v1262 = vsel %vm461, %v1219, 0
        %v1265 = vsel %vm461, %v1220, 0
        %v1268 = vsel %vm461, %v1221, 0
        %v1271 = vsel %vm461, %v1222, 0
        %1273 = vmatprep.subr.bf16.mxu0 0
        %1274 = vmatpush1.bf16.msra.mxu0 0
        %1275 = vmatprep.subr.bf16.mxu0 0
        %1276 = vmatpush1.bf16.msra.mxu0 0
        %1277 = vmatprep.subr.bf16.mxu0 0
        %1278 = vmatpush1.bf16.msra.mxu0 0
        %1279 = vmatprep.subr.bf16.mxu0 0
        %1280 = vmatpush1.bf16.msra.mxu0 0
        %1281 = vmatprep.subr.bf16.mxu0 0
        %1282 = vmatpush1.bf16.msra.mxu0 %v1250
        %1283 = vmatprep.subr.bf16.mxu0 0
        %1284 = vmatpush1.bf16.msra.mxu0 %v1249
        %1285 = vmatprep.subr.bf16.mxu0 0
        %1286 = vmatpush1.bf16.msra.mxu0 %v1248
        %1287 = vmatprep.subr.bf16.mxu0 0
        %1288 = vmatpush1.bf16.msra.mxu0 %v1247
        %1289 = vmatprep.subr.bf16.mxu0 0
        %1290 = vmatpush2.bf16.msra.mxu0 0
        %1291 = vmatprep.subr.bf16.mxu0 0
        %1292 = vmatpush2.bf16.msra.mxu0 0
        %1293 = vmatprep.subr.bf16.mxu0 0
        %1294 = vmatpush2.bf16.msra.mxu0 0
        %1295 = vmatprep.subr.bf16.mxu0 0
        %1296 = vmatpush2.bf16.msra.mxu0 0
        %1297 = vmatprep.subr.bf16.mxu0 0
        %1298 = vmatpush2.bf16.msra.mxu0 0
        %1299 = vmatprep.subr.bf16.mxu0 0
        %1300 = vmatpush2.bf16.msra.mxu0 0
        %1301 = vmatprep.subr.bf16.mxu0 0
        %1302 = vmatpush2.bf16.msra.mxu0 0
        %1303 = vmatprep.subr.bf16.mxu0 0
        %1304 = vmatpush2.bf16.msra.mxu0 0
        %1305 = vmatprep.mubr.bf16.mxu0 0
        %1306 = vmatmul.mubr.bf16.gmra.mxu0 %v1256
        %v1307 = vpop.f32.mrf.mxu0
        %v1308 = vadd.f32 0.0, %v1307
        %v1309 = vpop.f32.mrf.mxu0
        %v1310 = vpop.f32.mrf.mxu0
        %v1311 = vadd.f32 0.0, %v1310
        %v1312 = vpop.f32.mrf.mxu0
        %1313 = vmatprep.mubr.bf16.mxu0 0
        %1314 = vmatmul.mubr.bf16.gmra.mxu0 %v1259
        %v1315 = vpop.f32.mrf.mxu0
        %v1316 = vadd.f32 0.0, %v1315
        %v1317 = vpop.f32.mrf.mxu0
        %v1318 = vpop.f32.mrf.mxu0
        %v1319 = vadd.f32 0.0, %v1318
        %v1320 = vpop.f32.mrf.mxu0
        %1321 = vmatprep.mubr.bf16.mxu0 0
        %1322 = vmatmul.mubr.bf16.gmra.mxu0 %v1262
        %v1323 = vpop.f32.mrf.mxu0
        %v1324 = vadd.f32 0.0, %v1323
        %v1325 = vpop.f32.mrf.mxu0
        %v1326 = vpop.f32.mrf.mxu0
        %v1327 = vadd.f32 0.0, %v1326
        %v1328 = vpop.f32.mrf.mxu0
        %1329 = vmatprep.mubr.bf16.mxu0 0
        %1330 = vmatmul.mubr.bf16.gmra.mxu0 %v1265
        %v1331 = vpop.f32.mrf.mxu0
        %v1332 = vadd.f32 0.0, %v1331
        %v1333 = vpop.f32.mrf.mxu0
        %v1334 = vpop.f32.mrf.mxu0
        %v1335 = vadd.f32 0.0, %v1334
        %v1336 = vpop.f32.mrf.mxu0
        %1337 = vmatprep.mubr.bf16.mxu0 0
        %1338 = vmatmul.mubr.bf16.gmra.mxu0 %v1268
        %v1339 = vpop.f32.mrf.mxu0
        %v1340 = vadd.f32 0.0, %v1339
        %v1341 = vpop.f32.mrf.mxu0
        %v1342 = vpop.f32.mrf.mxu0
        %v1343 = vadd.f32 0.0, %v1342
        %v1344 = vpop.f32.mrf.mxu0
        %1345 = vmatprep.mubr.bf16.mxu0 0
        %1346 = vmatmul.mubr.bf16.gmra.mxu0 %v1271
        %v1347 = vpop.f32.mrf.mxu0
        %v1348 = vadd.f32 0.0, %v1347
        %v1349 = vpop.f32.mrf.mxu0
        %v1350 = vpop.f32.mrf.mxu0
        %v1351 = vadd.f32 0.0, %v1350
        %v1352 = vpop.f32.mrf.mxu0
        %1353 = vdwg.mxu0
        %1366 = vrot.lane.b32.xlu0 %v1308, 64
        %v1367 = vpop.permute.xlu0 %1366
        %1368 = vrot.lane.b32.xlu0 %v1311, 64
        %v1369 = vpop.permute.xlu0 %1368
        %1370 = vrot.lane.b32.xlu0 %v1316, 64
        %v1371 = vpop.permute.xlu0 %1370
        %1372 = vrot.lane.b32.xlu0 %v1319, 64
        %v1373 = vpop.permute.xlu0 %1372
        %1374 = vrot.lane.b32.xlu0 %v1324, 64
        %v1375 = vpop.permute.xlu0 %1374
        %1376 = vrot.lane.b32.xlu0 %v1327, 64
        %v1377 = vpop.permute.xlu0 %1376
        %1378 = vrot.lane.b32.xlu0 %v1332, 64
        %v1379 = vpop.permute.xlu0 %1378
        %1380 = vrot.lane.b32.xlu0 %v1335, 64
        %v1381 = vpop.permute.xlu0 %1380
        %1382 = vrot.lane.b32.xlu0 %v1340, 64
        %v1383 = vpop.permute.xlu0 %1382
        %1384 = vrot.lane.b32.xlu0 %v1343, 64
        %v1385 = vpop.permute.xlu0 %1384
        %1386 = vrot.lane.b32.xlu0 %v1348, 64
        %v1387 = vpop.permute.xlu0 %1386
        %1388 = vrot.lane.b32.xlu0 %v1351, 64
        %v1389 = vpop.permute.xlu0 %1388
        %v1402 = vadd.f32 %v1102, %v1367
        %v1403 = vadd.f32 %v1103, %v1369
        %v1404 = vadd.f32 %v1104, %v1371
        %v1405 = vadd.f32 %v1105, %v1373
        %v1406 = vadd.f32 %v1106, %v1375
        %v1407 = vadd.f32 %v1107, %v1377
        %v1408 = vadd.f32 %v1108, %v1379
        %v1409 = vadd.f32 %v1109, %v1381
        %v1410 = vadd.f32 %v1110, %v1383
        %v1411 = vadd.f32 %v1111, %v1385
        %v1412 = vadd.f32 %v1112, %v1387
        %v1413 = vadd.f32 %v1113, %v1389
        %v1414 = vlaneseq
        %v1415 = vshrl.u32 %v1414, 7
        %v1416 = vsub.s32 4, %v1415
        %v1417 = vrot.slane %v280, %v1416
        %1419 = vrot.lane.b32.xlu0 %v1417, 64
        %v1420 = vpop.permute.xlu0 %1419
        %v1422 = vadd.f32 %v1402, %v1420
        %v1423 = vadd.f32 %v1403, %v1420
        %v1424 = vadd.f32 %v1404, %v1420
        %v1425 = vadd.f32 %v1405, %v1420
        %v1426 = vadd.f32 %v1406, %v1420
        %v1427 = vadd.f32 %v1407, %v1420
        %v1428 = vadd.f32 %v1408, %v1420
        %v1429 = vadd.f32 %v1409, %v1420
        %v1430 = vadd.f32 %v1410, %v1420
        %v1431 = vadd.f32 %v1411, %v1420
        %v1432 = vadd.f32 %v1412, %v1420
        %v1433 = vadd.f32 %v1413, %v1420
        %v1434 = vpack.c.bf16 %v1423, %v1422
        %v1435 = vpack.c.bf16 %v1425, %v1424
        %v1436 = vpack.c.bf16 %v1427, %v1426
        %v1437 = vpack.c.bf16 %v1429, %v1428
        %v1438 = vpack.c.bf16 %v1431, %v1430
        %v1439 = vpack.c.bf16 %v1433, %v1432
        %1446 = vrot.lane.b32.xlu0 %v1434, 64
        %v1447 = vpop.permute.xlu0 %1446
        %1448 = vrot.lane.b32.xlu0 %v1435, 64
        %v1449 = vpop.permute.xlu0 %1448
        %1450 = vrot.lane.b32.xlu0 %v1436, 64
        %v1451 = vpop.permute.xlu0 %1450
        %1452 = vrot.lane.b32.xlu0 %v1437, 64
        %v1453 = vpop.permute.xlu0 %1452
        %1454 = vrot.lane.b32.xlu0 %v1438, 64
        %v1455 = vpop.permute.xlu0 %1454
        %1456 = vrot.lane.b32.xlu0 %v1439, 64
        %v1457 = vpop.permute.xlu0 %1456
        %v1465 = vsel %vm601, %v278, 0
        %1467 = vmatprep.subr.bf16.mxu0 0
        %1468 = vmatpush1.bf16.msra.mxu0 0
        %1469 = vmatprep.subr.bf16.mxu0 0
        %1470 = vmatpush1.bf16.msra.mxu0 0
        %1471 = vmatprep.subr.bf16.mxu0 0
        %1472 = vmatpush1.bf16.msra.mxu0 %v1457
        %1473 = vmatprep.subr.bf16.mxu0 0
        %1474 = vmatpush1.bf16.msra.mxu0 %v1455
        %1475 = vmatprep.subr.bf16.mxu0 0
        %1476 = vmatpush1.bf16.msra.mxu0 %v1453
        %1477 = vmatprep.subr.bf16.mxu0 0
        %1478 = vmatpush1.bf16.msra.mxu0 %v1451
        %1479 = vmatprep.subr.bf16.mxu0 0
        %1480 = vmatpush1.bf16.msra.mxu0 %v1449
        %1481 = vmatprep.subr.bf16.mxu0 0
        %1482 = vmatpush1.bf16.msra.mxu0 %v1447
        %1483 = vmatprep.subr.bf16.mxu0 0
        %1484 = vmatpush2.bf16.msra.mxu0 0
        %1485 = vmatprep.subr.bf16.mxu0 0
        %1486 = vmatpush2.bf16.msra.mxu0 0
        %1487 = vmatprep.subr.bf16.mxu0 0
        %1488 = vmatpush2.bf16.msra.mxu0 0
        %1489 = vmatprep.subr.bf16.mxu0 0
        %1490 = vmatpush2.bf16.msra.mxu0 0
        %1491 = vmatprep.subr.bf16.mxu0 0
        %1492 = vmatpush2.bf16.msra.mxu0 0
        %1493 = vmatprep.subr.bf16.mxu0 0
        %1494 = vmatpush2.bf16.msra.mxu0 0
        %1495 = vmatprep.subr.bf16.mxu0 0
        %1496 = vmatpush2.bf16.msra.mxu0 0
        %1497 = vmatprep.subr.bf16.mxu0 0
        %1498 = vmatpush2.bf16.msra.mxu0 0
        %1499 = vmatprep.mubr.bf16.mxu0 0
        %1500 = vmatmul.mubr.bf16.gmra.mxu0 %v1465
        %v1501 = vpop.f32.mrf.mxu0
        %v1502 = vadd.f32 0.0, %v1501
        %v1503 = vpop.f32.mrf.mxu0
        %v1504 = vpop.f32.mrf.mxu0
        %v1505 = vpop.f32.mrf.mxu0
        %1506 = vdwg.mxu0
        %v1507 = vpack.c.bf16 %v1502, %v1502
        %v1508 = vld [vmem:[%s3 + $0x90] sm:$0xf]
        %v1509 = vld [vmem:[%s3 + $0x94] sm:$0xf]
        %v1510 = vld [vmem:[%s3 + $0x98] sm:$0xf]
        %v1511 = vld [vmem:[%s3 + $0x9c] sm:$0xf]
        %v1512 = vld [vmem:[%s3 + $0xa0] sm:$0xf]
        %v1513 = vld [vmem:[%s3 + $0xa4] sm:$0xf]
        %v1514 = vld [vmem:[%s3 + $0xa8] sm:$0xf]
        %v1515 = vld [vmem:[%s3 + $0xac] sm:$0xf]
        %v1517 = vrot.slane %v1507, 1
        %1518 = vrot.lane.b32.xlu0 %v1517, 96
        %v1519 = vpop.permute.xlu0 %1518
        %v1524 = vunpack.c.l.b16 %v1512
        %v1525 = vunpack.c.l.b16 %v1513
        %v1526 = vunpack.c.l.b16 %v1514
        %v1527 = vunpack.c.l.b16 %v1515
        %v1528 = vpack.c.b16 %v1525, %v1524
        %v1529 = vpack.c.b16 %v1527, %v1526
        %vm1532 = vcmask 261120
        %v1534 = vsel %vm1532, %v1519, 0
        %1536 = vmatprep.subr.bf16.mxu0 0
        %1537 = vmatpush1.bf16.msra.mxu0 0
        %1538 = vmatprep.subr.bf16.mxu0 0
        %1539 = vmatpush1.bf16.msra.mxu0 0
        %1540 = vmatprep.subr.bf16.mxu0 0
        %1541 = vmatpush1.bf16.msra.mxu0 0
        %1542 = vmatprep.subr.bf16.mxu0 0
        %1543 = vmatpush1.bf16.msra.mxu0 0
        %1544 = vmatprep.subr.bf16.mxu0 0
        %1545 = vmatpush1.bf16.msra.mxu0 0
        %1546 = vmatprep.subr.bf16.mxu0 0
        %1547 = vmatpush1.bf16.msra.mxu0 0
        %1548 = vmatprep.subr.bf16.mxu0 0
        %1549 = vmatpush1.bf16.msra.mxu0 %v1529
        %1550 = vmatprep.subr.bf16.mxu0 0
        %1551 = vmatpush1.bf16.msra.mxu0 %v1528
        %1552 = vmatprep.subr.bf16.mxu0 0
        %1553 = vmatpush2.bf16.msra.mxu0 0
        %1554 = vmatprep.subr.bf16.mxu0 0
        %1555 = vmatpush2.bf16.msra.mxu0 0
        %1556 = vmatprep.subr.bf16.mxu0 0
        %1557 = vmatpush2.bf16.msra.mxu0 0
        %1558 = vmatprep.subr.bf16.mxu0 0
        %1559 = vmatpush2.bf16.msra.mxu0 0
        %1560 = vmatprep.subr.bf16.mxu0 0
        %1561 = vmatpush2.bf16.msra.mxu0 0
        %1562 = vmatprep.subr.bf16.mxu0 0
        %1563 = vmatpush2.bf16.msra.mxu0 0
        %1564 = vmatprep.subr.bf16.mxu0 0
        %1565 = vmatpush2.bf16.msra.mxu0 0
        %1566 = vmatprep.subr.bf16.mxu0 0
        %1567 = vmatpush2.bf16.msra.mxu0 0
        %1568 = vmatprep.mubr.bf16.mxu0 0
        %1569 = vmatmul.mubr.bf16.gmra.mxu0 %v1534
        %v1570 = vpop.f32.mrf.mxu0
        %v1571 = vadd.f32 0.0, %v1570
        %v1572 = vpop.f32.mrf.mxu0
        %v1573 = vpop.f32.mrf.mxu0
        %v1574 = vpop.f32.mrf.mxu0
        %1575 = vdwg.mxu0
        %v1580 = vunpack.c.l.b16 %v1508
        %v1581 = vunpack.c.l.b16 %v1509
        %v1582 = vunpack.c.l.b16 %v1510
        %v1583 = vunpack.c.l.b16 %v1511
        %v1584 = vpack.c.b16 %v1581, %v1580
        %v1585 = vpack.c.b16 %v1583, %v1582
        %v1589 = vsel %vm1532, %v1507, 0
        %1591 = vmatprep.subr.bf16.mxu0 0
        %1592 = vmatpush1.bf16.msra.mxu0 0
        %1593 = vmatprep.subr.bf16.mxu0 0
        %1594 = vmatpush1.bf16.msra.mxu0 0
        %1595 = vmatprep.subr.bf16.mxu0 0
        %1596 = vmatpush1.bf16.msra.mxu0 0
        %1597 = vmatprep.subr.bf16.mxu0 0
        %1598 = vmatpush1.bf16.msra.mxu0 0
        %1599 = vmatprep.subr.bf16.mxu0 0
        %1600 = vmatpush1.bf16.msra.mxu0 0
        %1601 = vmatprep.subr.bf16.mxu0 0
        %1602 = vmatpush1.bf16.msra.mxu0 0
        %1603 = vmatprep.subr.bf16.mxu0 0
        %1604 = vmatpush1.bf16.msra.mxu0 %v1585
        %1605 = vmatprep.subr.bf16.mxu0 0
        %1606 = vmatpush1.bf16.msra.mxu0 %v1584
        %1607 = vmatprep.subr.bf16.mxu0 0
        %1608 = vmatpush2.bf16.msra.mxu0 0
        %1609 = vmatprep.subr.bf16.mxu0 0
        %1610 = vmatpush2.bf16.msra.mxu0 0
        %1611 = vmatprep.subr.bf16.mxu0 0
        %1612 = vmatpush2.bf16.msra.mxu0 0
        %1613 = vmatprep.subr.bf16.mxu0 0
        %1614 = vmatpush2.bf16.msra.mxu0 0
        %1615 = vmatprep.subr.bf16.mxu0 0
        %1616 = vmatpush2.bf16.msra.mxu0 0
        %1617 = vmatprep.subr.bf16.mxu0 0
        %1618 = vmatpush2.bf16.msra.mxu0 0
        %1619 = vmatprep.subr.bf16.mxu0 0
        %1620 = vmatpush2.bf16.msra.mxu0 0
        %1621 = vmatprep.subr.bf16.mxu0 0
        %1622 = vmatpush2.bf16.msra.mxu0 0
        %1623 = vmatprep.mubr.bf16.mxu0 0
        %1624 = vmatmul.mubr.bf16.gmra.mxu0 %v1589
        %v1625 = vpop.f32.mrf.mxu0
        %v1626 = vadd.f32 %v1571, %v1625
        %v1627 = vpop.f32.mrf.mxu0
        %v1628 = vpop.f32.mrf.mxu0
        %v1629 = vpop.f32.mrf.mxu0
        %1630 = vdwg.mxu0
        %v1631 = vlaneseq
        %v1632 = vshrl.u32 %v1631, 7
        %v1633 = vsub.s32 5, %v1632
        %v1634 = vrot.slane %v280, %v1633
        %v1635 = vadd.f32 %v1626, %v1634
        %vm1636 = vcmp.gt.f32.partialorder %v1635, 0.0
        %v1637 = vmul.f32 %v1635, 0.01
        %v1638 = vsel %vm1636, %v1635, %v1637
        %v1639 = vpack.c.bf16 %v1638, %v1638
        %v1640 = vld [vmem:[%s3 + $0xb0] sm:$0xf]
        %v1641 = vld [vmem:[%s3 + $0xb4] sm:$0xf]
        %v1642 = vld [vmem:[%s3 + $0xb8] sm:$0xf]
        %v1643 = vld [vmem:[%s3 + $0xbc] sm:$0xf]
        %v1644 = vlaneseq
        %v1645 = vshrl.u32 %v1644, 7
        %v1646 = vsub.s32 6, %v1645
        %v1647 = vrot.slane %v280, %v1646
        %v1652 = vunpack.c.l.b16 %v1640
        %v1653 = vunpack.c.l.b16 %v1641
        %v1654 = vunpack.c.l.b16 %v1642
        %v1655 = vunpack.c.l.b16 %v1643
        %v1656 = vpack.c.b16 %v1653, %v1652
        %v1657 = vpack.c.b16 %v1655, %v1654
        %v1661 = vsel %vm1532, %v1639, 0
        %1663 = vmatprep.subr.bf16.mxu0 0
        %1664 = vmatpush1.bf16.msra.mxu0 0
        %1665 = vmatprep.subr.bf16.mxu0 0
        %1666 = vmatpush1.bf16.msra.mxu0 0
        %1667 = vmatprep.subr.bf16.mxu0 0
        %1668 = vmatpush1.bf16.msra.mxu0 0
        %1669 = vmatprep.subr.bf16.mxu0 0
        %1670 = vmatpush1.bf16.msra.mxu0 0
        %1671 = vmatprep.subr.bf16.mxu0 0
        %1672 = vmatpush1.bf16.msra.mxu0 0
        %1673 = vmatprep.subr.bf16.mxu0 0
        %1674 = vmatpush1.bf16.msra.mxu0 0
        %1675 = vmatprep.subr.bf16.mxu0 0
        %1676 = vmatpush1.bf16.msra.mxu0 %v1657
        %1677 = vmatprep.subr.bf16.mxu0 0
        %1678 = vmatpush1.bf16.msra.mxu0 %v1656
        %1679 = vmatprep.subr.bf16.mxu0 0
        %1680 = vmatpush2.bf16.msra.mxu0 0
        %1681 = vmatprep.subr.bf16.mxu0 0
        %1682 = vmatpush2.bf16.msra.mxu0 0
        %1683 = vmatprep.subr.bf16.mxu0 0
        %1684 = vmatpush2.bf16.msra.mxu0 0
        %1685 = vmatprep.subr.bf16.mxu0 0
        %1686 = vmatpush2.bf16.msra.mxu0 0
        %1687 = vmatprep.subr.bf16.mxu0 0
        %1688 = vmatpush2.bf16.msra.mxu0 0
        %1689 = vmatprep.subr.bf16.mxu0 0
        %1690 = vmatpush2.bf16.msra.mxu0 0
        %1691 = vmatprep.subr.bf16.mxu0 0
        %1692 = vmatpush2.bf16.msra.mxu0 0
        %1693 = vmatprep.subr.bf16.mxu0 0
        %1694 = vmatpush2.bf16.msra.mxu0 0
        %1695 = vmatprep.mubr.bf16.mxu0 0
        %1696 = vmatmul.mubr.bf16.gmra.mxu0 %v1661
        %v1697 = vpop.f32.mrf.mxu0
        %v1698 = vadd.f32 %v1647, %v1697
        %v1699 = vpop.f32.mrf.mxu0
        %v1700 = vpop.f32.mrf.mxu0
        %v1701 = vpop.f32.mrf.mxu0
        %1702 = vdwg.mxu0
        %v1703 = vmax.f32 %v1698, 0.0
        %v1704 = vpack.c.bf16 %v1703, %v1703
        %v1705 = vld [vmem:[%s3 + $0xc0] sm:$0xf]
        %v1706 = vld [vmem:[%s3 + $0xc4] sm:$0xf]
        %v1707 = vld [vmem:[%s3 + $0xc8] sm:$0xf]
        %v1708 = vld [vmem:[%s3 + $0xcc] sm:$0xf]
        %v1709 = vlaneseq
        %v1710 = vshrl.u32 %v1709, 7
        %v1711 = vsub.s32 7, %v1710
        %v1712 = vrot.slane %v280, %v1711
        %v1717 = vunpack.c.l.b16 %v1705
        %v1718 = vunpack.c.l.b16 %v1706
        %v1719 = vunpack.c.l.b16 %v1707
        %v1720 = vunpack.c.l.b16 %v1708
        %v1721 = vpack.c.b16 %v1718, %v1717
        %v1722 = vpack.c.b16 %v1720, %v1719
        %v1726 = vsel %vm1532, %v1704, 0
        %1728 = vmatprep.subr.bf16.mxu0 0
        %1729 = vmatpush1.bf16.msra.mxu0 0
        %1730 = vmatprep.subr.bf16.mxu0 0
        %1731 = vmatpush1.bf16.msra.mxu0 0
        %1732 = vmatprep.subr.bf16.mxu0 0
        %1733 = vmatpush1.bf16.msra.mxu0 0
        %1734 = vmatprep.subr.bf16.mxu0 0
        %1735 = vmatpush1.bf16.msra.mxu0 0
        %1736 = vmatprep.subr.bf16.mxu0 0
        %1737 = vmatpush1.bf16.msra.mxu0 0
        %1738 = vmatprep.subr.bf16.mxu0 0
        %1739 = vmatpush1.bf16.msra.mxu0 0
        %1740 = vmatprep.subr.bf16.mxu0 0
        %1741 = vmatpush1.bf16.msra.mxu0 %v1722
        %1742 = vmatprep.subr.bf16.mxu0 0
        %1743 = vmatpush1.bf16.msra.mxu0 %v1721
        %1744 = vmatprep.subr.bf16.mxu0 0
        %1745 = vmatpush2.bf16.msra.mxu0 0
        %1746 = vmatprep.subr.bf16.mxu0 0
        %1747 = vmatpush2.bf16.msra.mxu0 0
        %1748 = vmatprep.subr.bf16.mxu0 0
        %1749 = vmatpush2.bf16.msra.mxu0 0
        %1750 = vmatprep.subr.bf16.mxu0 0
        %1751 = vmatpush2.bf16.msra.mxu0 0
        %1752 = vmatprep.subr.bf16.mxu0 0
        %1753 = vmatpush2.bf16.msra.mxu0 0
        %1754 = vmatprep.subr.bf16.mxu0 0
        %1755 = vmatpush2.bf16.msra.mxu0 0
        %1756 = vmatprep.subr.bf16.mxu0 0
        %1757 = vmatpush2.bf16.msra.mxu0 0
        %1758 = vmatprep.subr.bf16.mxu0 0
        %1759 = vmatpush2.bf16.msra.mxu0 0
        %1760 = vmatprep.mubr.bf16.mxu0 0
        %1761 = vmatmul.mubr.bf16.gmra.mxu0 %v1726
        %v1762 = vpop.f32.mrf.mxu0
        %v1763 = vadd.f32 %v1712, %v1762
        %v1764 = vpop.f32.mrf.mxu0
        %v1765 = vpop.f32.mrf.mxu0
        %v1766 = vpop.f32.mrf.mxu0
        %1767 = vdwg.mxu0
        %vm1768 = vcmask 25600
        %v1769 = vsel %vm1768, %v1763, -inf
        %1770 = vmax.xlane.f32.xlu0 %v1769
        %v1771 = vpop.xlane.xlu0 %1770
        %v1772 = vsub.f32 %v1763, %v1771
        %v1773 = vmul.f32 %v1772, 1.442695
        %v1774 = vpow.pop %v1773
        %v1775 = vsel %vm1768, %v1774, 0.0
        %1776 = vadd.xlane.f32.xlu0 %v1775
        %v1777 = vpop.xlane.xlu0 %1776
        %v1778 = vlog2.pop %v1777
        %v1779 = vmul.f32 %v1778, 0.6931472
        %v1780 = vsub.f32 %v1772, %v1779
        %vm1781 = vcmask 31744
        %v1782 = vsel %vm1781, %v1780, 0.0
        %1783 = vst [vmem:[%s243] sm:$0x3] %v1782
        %s1784 = sand.u32 %s128, 1
        %s1785 = scalar_lea.sflag [#allocation4], %s1784
        %s1786 = sand.u32 %s128, 1
        %s1787 = smul.addr %s1786, 2
        %s1788 = scalar_lea.vmem [#allocation5], %s1787
        // Predicated region
        $region41: #{network_forward.1} parent=35 // pred_check
          %p1789 = pneg %p138
        $region42: #{network_forward.1} parent=35 // pred_check_branch
          %1791 = sbr.rel (%p1789) target = $region44
        $region43: #{network_forward.1} parent=35 // pred_region
          %s1793 = ssub.s32 32, 32
          %1794 = vsyncadd %s1785, %s1793
          %s1795 = smul.addr %s21, 32
          %s1796 = scalar_lea.hbm %s4, %s1795
          %s1798 = sshll.u32 %s1788, 4
          %s1799 = int_to_ptr.vmem [resolvable:$true] %s1798
          %1801 = dma.vmem_to_hbm [thread:$0]  %s1799, 32, %s1796, %s1785
        $region44: #{network_forward.1} parent=35 // pred_fallthru
          _
      $region36: #{network_forward.1} parent=5 // pred_fallthru
        _
      %p1802 = scmp.le.s32.totalorder 2, %s16
      // Predicated region
      $region45: #{network_forward.1} parent=5 // pred_check
        %p1803 = pneg %p1802
      $region46: #{network_forward.1} parent=5 // pred_check_branch
        %1805 = sbr.rel (%p1803) target = $region48
      $region47: #{network_forward.1} parent=5 // pred_region
        %s1806 = ssub.s32 %s16, 2
        // Predicated region
        $region49: #{network_forward.1} parent=47 // pred_check
          %p1807 = pneg %p144
        $region50: #{network_forward.1} parent=47 // pred_check_branch
          %1809 = sbr.rel (%p1807) target = $region52
        $region51: #{network_forward.1} parent=47 // pred_region
          %s1810 = sand.u32 %s129, 1
          %s1811 = scalar_lea.sflag [#allocation4], %s1810
          %s1812 = sand.u32 %s129, 1
          %s1813 = smul.addr %s1812, 2
          %s1814 = scalar_lea.vmem [#allocation5], %s1813
          %1815 = dma.done %s1811, 32
        $region52: #{network_forward.1} parent=47 // pred_fallthru
          _
      $region48: #{network_forward.1} parent=5 // pred_fallthru
        _
    $region6: #{network_forward.1} parent=1 // loop_footer
      %s20 = sadd.s32 1, %s16
    $region7: #{network_forward.1} parent=1 // loop_footer_branch
      %15 = sbr.rel target = $region3
    $region8: #{network_forward.1} parent=1 // loop_exit
      _
    %1816 = vsyncpa [#allocation3], 1
    %s1817 = scalar_lea.sflag [#allocation3], 1
    %1818 = vsyncpa %s1817, 1
    %1819 = vsyncpa [#allocation4], 1
    %s1820 = scalar_lea.sflag [#allocation4], 1
    %1821 = vsyncpa %s1820, 1

</llo_original>
